<compile_context>
chip_gen: v7x
topology: tpu7x:2x2x1
jax: 0.10.0
libtpu: 0.0.40
codegen_flags: <defaults>
</compile_context>

<pallas_src>
import functools

import jax
import jax.numpy as jnp
from jax.experimental import pallas as pl
from jax.experimental.pallas import tpu as pltpu


# ----------------------------- hardware-aware sizing ---------------------------------
def _vmem_limit_bytes():
    """Generation-aware scoped-VMEM limit (v5e/v6e: 128 MiB phys, v7x: 64 MiB)."""
    try:
        cap = int(pltpu.get_tpu_info().vmem_capacity_bytes)
    except Exception:
        cap = 64 * 1024 * 1024                       # conservative (v7x) fallback
    return min((cap * 3) // 4, 96 * 1024 * 1024)


def _pick_row_tile(h, w, cin, cout, vmem_limit):
    """Largest divisor-of-H row tile whose per-step VMEM estimate fits, preferring
    th*W aligned to 256 (v6e/v7x 256-wide MXU), then 128 (v5e), then 8 (sublanes)."""
    budget = vmem_limit // 2                         # headroom for Mosaic scratch etc.

    def step_bytes(th):
        halo_in = (th + 2) * w * cin * 2             # bf16 top+mid+bot input blocks
        weight = 9 * cin * cout * 2                  # bf16 (grid-invariant)
        z_out = th * w * cout * 2                    # bf16 pre-BN conv output
        stats = 8 * cout * 4
        dbuf = 2 * (halo_in + weight + z_out + stats + 2 * cin * 4)
        slab = (th + 2) * (w + 2) * cin * 2          # single-buffer VMEM scratch
        temps = th * w * (cout * 4 + cin * 4 + cin * 2)   # f32 acc + activated taps
        return dbuf + slab + temps

    cands = [d for d in range(1, h + 1) if h % d == 0 and step_bytes(d) <= budget]
    if not cands:
        return h                                     # tiny shapes / give up gracefully
    for align in (256, 128, 8):
        good = [d for d in cands if (d * w) % align == 0 and (d % 8 == 0 or d == h)]
        if good:
            return max(good)
    return h


# ------------------------------------ kernels ---------------------------------------
def _conv3x3_stats_kernel(xt_ref, xm_ref, xb_ref, w_ref, scale_ref, shift_ref,
                          z_ref, st_ref, slab_ref,
                          *, fuse_input_bn_act, negative_slope, use_fused_k):
    """3x3 conv (pad=1, bias folded into BN) on one (row_tile, W) slab + BN partials.

    xt/xm/xb : (1,1,W,Cin) / (1,th,W,Cin) / (1,1,W,Cin) bf16 halo-row / tile / halo-row
               of the *un-padded* NHWC activation (same HBM array, three BlockSpecs).
    w_ref    : (9,Cin,Cout) bf16 (accumulated-matmul path) or (9*Cin,Cout) (fused-K).
    scale/shift : (1,Cin) f32 input-side BN affine (read only when fuse_input_bn_act).
    z_ref    : (1, th*W, Cout) bf16 raw (pre-BN) conv output.
    st_ref   : (1, 1, 8, Cout) f32 [tile mean ; centered M2 ; zero pad].
    slab_ref : (th+2, W+2, Cin) bf16 VMEM scratch for the zero-padded haloed slab.
    """
    _, th, w, cin = xm_ref.shape
    cout = z_ref.shape[-1]
    t = pl.program_id(1)
    nt = pl.num_programs(1)

    def prep(v):                                     # raw rows -> (activated) bf16 rows
        if fuse_input_bn_act:
            a = v.astype(jnp.float32) * scale_ref[...] + shift_ref[...]
            a = jnp.where(a >= 0, a, negative_slope * a)
            return a.astype(jnp.bfloat16)
        return v

    # Assemble the zero-padded (th+2, W+2, Cin) slab in VMEM.  The module pads AFTER
    # BN + activation, so image-boundary halo rows and the W border stay exactly zero.
    top_keep = (t > 0).astype(jnp.bfloat16)          # scalar 0/1 boundary masks
    bot_keep = (t < nt - 1).astype(jnp.bfloat16)
    slab_ref[0:1, 1:w + 1, :] = prep(xt_ref[0]) * top_keep
    slab_ref[1:th + 1, 1:w + 1, :] = prep(xm_ref[0])
    slab_ref[th + 1:th + 2, 1:w + 1, :] = prep(xb_ref[0]) * bot_keep
    zcol = jnp.zeros((th + 2, 1, cin), jnp.bfloat16)
    slab_ref[:, 0:1, :] = zcol
    slab_ref[:, w + 1:w + 2, :] = zcol

    if use_fused_k:
        # Very-small-Cin path: single K=9*Cin MXU matmul from an im2col patches block.
        taps = [slab_ref[dy:dy + th, dx:dx + w, :]
                for dy in range(3) for dx in range(3)]
        patches = jnp.concatenate(taps, axis=-1).reshape(th * w, 9 * cin)
        acc = jnp.dot(patches, w_ref[...], preferred_element_type=jnp.float32)
    else:
        # General path: 9 accumulated matmuls, no lane-axis concat / patches buffer.
        acc = jnp.zeros((th * w, cout), jnp.float32)
        for k in range(9):
            dy, dx = divmod(k, 3)
            tap = slab_ref[dy:dy + th, dx:dx + w, :].reshape(th * w, cin)
            acc += jnp.dot(tap, w_ref[k], preferred_element_type=jnp.float32)

    z_ref[0] = acc.astype(jnp.bfloat16)

    # Per-tile BN partials: tile mean + centered M2 (stable; combined with Chan's
    # parallel formula in the wrapper).  Padded to 8 sublanes -> unmasked store.
    mean = jnp.sum(acc, axis=0, keepdims=True) * (1.0 / (th * w))
    m2 = jnp.sum((acc - mean) ** 2, axis=0, keepdims=True)
    st_ref[0, 0] = jnp.concatenate(
        [mean, m2, jnp.zeros((6, cout), jnp.float32)], axis=0)


def _bn_act_kernel(z_ref, scale_ref, shift_ref, o_ref, *, negative_slope):
    """Final BatchNorm affine + LeakyReLU on a lane-dense (th, W*C) slab."""
    y = z_ref[0].astype(jnp.float32) * scale_ref[...] + shift_ref[...]
    o_ref[0] = jnp.where(y >= 0, y, negative_slope * y)


# ------------------------------------ wrappers ---------------------------------------
def _prep_weight(w_oihw, use_fused_k):
    """(Cout, Cin, 3, 3) -> (9, Cin, Cout) bf16 (or (9*Cin, Cout) for fused-K)."""
    cout, cin, kh, kw = w_oihw.shape
    w = jnp.transpose(w_oihw, (2, 3, 1, 0)).astype(jnp.bfloat16)     # (3,3,Cin,Cout)
    if use_fused_k:
        return w.reshape(kh * kw * cin, cout)
    return w.reshape(kh * kw, cin, cout)


def _finalize_bn(stats, gamma, beta, tile_elems, eps):
    """Combine per-tile (mean, M2) partials with Chan's formula -> BN scale/shift."""
    st = stats.reshape(-1, stats.shape[-2], stats.shape[-1])
    means, m2s = st[:, 0, :], st[:, 1, :]
    n_tiles = st.shape[0]
    mean = jnp.mean(means, axis=0)
    m2 = jnp.sum(m2s, axis=0) + tile_elems * jnp.sum((means - mean) ** 2, axis=0)
    var = jnp.maximum(m2 / (n_tiles * tile_elems), 0.0)
    scale = gamma.astype(jnp.float32) * jax.lax.rsqrt(var + eps)
    shift = beta.astype(jnp.float32) - mean * scale
    return scale.reshape(1, -1), shift.reshape(1, -1)


def _conv_bn_stats_call(x_nhwc, weight, scale_in, shift_in, *, row_tile,
                        fuse_input_bn_act, negative_slope, use_fused_k, vmem_limit):
    n, h, w, cin = x_nhwc.shape
    cout = weight.shape[-1]
    th = row_tile
    nt = h // th

    kern = functools.partial(
        _conv3x3_stats_kernel, fuse_input_bn_act=fuse_input_bn_act,
        negative_slope=negative_slope, use_fused_k=use_fused_k)

    cost = pl.CostEstimate(
        flops=2 * n * h * w * 9 * cin * cout,
        transcendentals=0,
        bytes_accessed=(x_nhwc.size * 2 + weight.size * 2
                        + n * h * w * cout * 2 + n * nt * 8 * cout * 4))

    return pl.pallas_call(
        kern,
        grid=(n, nt),
        in_specs=[
            # top halo row / row tile / bottom halo row of the SAME un-padded array.
            pl.BlockSpec((1, 1, w, cin),
                         lambda b, t: (b, jnp.maximum(t * th - 1, 0), 0, 0)),
            pl.BlockSpec((1, th, w, cin), lambda b, t: (b, t, 0, 0)),
            pl.BlockSpec((1, 1, w, cin),
                         lambda b, t: (b, jnp.minimum(t * th + th, h - 1), 0, 0)),
            pl.BlockSpec(weight.shape, lambda b, t: (0,) * weight.ndim),
            pl.BlockSpec((1, cin), lambda b, t: (0, 0)),
            pl.BlockSpec((1, cin), lambda b, t: (0, 0)),
        ],
        out_specs=(
            pl.BlockSpec((1, th * w, cout), lambda b, t: (b, t, 0)),
            pl.BlockSpec((1, 1, 8, cout), lambda b, t: (b, t, 0, 0)),
        ),
        out_shape=(
            jax.ShapeDtypeStruct((n, h * w, cout), jnp.bfloat16),
            jax.ShapeDtypeStruct((n, nt, 8, cout), jnp.float32),
        ),
        scratch_shapes=[pltpu.VMEM((th + 2, w + 2, cin), jnp.bfloat16)],
        compiler_params=pltpu.CompilerParams(
            dimension_semantics=("parallel", "parallel"),
            vmem_limit_bytes=vmem_limit),
        cost_estimate=cost,
    )(x_nhwc, x_nhwc, x_nhwc, weight, scale_in, shift_in)


def _bn_act_call(z, scale, shift, *, h, w, cout, row_tile, negative_slope, vmem_limit):
    n = z.shape[0]
    th = row_tile
    nt = h // th
    zl = z.reshape(n, h, w * cout)                   # free lane-dense view of NHWC z2
    scale_l = jnp.tile(scale, (1, w))                # (1, W*C): lane j -> channel j % C
    shift_l = jnp.tile(shift, (1, w))
    kern = functools.partial(_bn_act_kernel, negative_slope=negative_slope)
    out = pl.pallas_call(
        kern,
        grid=(n, nt),
        in_specs=[
            pl.BlockSpec((1, th, w * cout), lambda b, t: (b, t, 0)),
            pl.BlockSpec((1, w * cout), lambda b, t: (0, 0)),
            pl.BlockSpec((1, w * cout), lambda b, t: (0, 0)),
        ],
        out_specs=pl.BlockSpec((1, th, w * cout), lambda b, t: (b, t, 0)),
        out_shape=jax.ShapeDtypeStruct((n, h, w * cout), jnp.float32),
        compiler_params=pltpu.CompilerParams(
            dimension_semantics=("parallel", "parallel"),
            vmem_limit_bytes=vmem_limit),
    )(zl, scale_l, shift_l)
    return out.reshape(n, h, w, cout)


def double_conv(x_nchw, params, leakyness=0.0, row_tile=None, eps=1e-5, conv_impl=None):
    """DoubleConv forward.  NCHW in/out to match the PyTorch module.

    conv_impl: None (auto), "multi" (9 accumulated matmuls), or "fused_k" (im2col)."""
    w1, g1, be1 = params["w1"], params["g1"], params["be1"]
    w2, g2, be2 = params["w2"], params["g2"], params["be2"]
    # Conv biases (params["b1"], params["b2"]) cancel under training-mode BN -> folded.
    n, cin, h, w = x_nchw.shape
    cmid, cout = w1.shape[0], w2.shape[0]
    vmem_limit = _vmem_limit_bytes()

    th = row_tile if row_tile is not None else _pick_row_tile(
        h, w, max(cin, cmid), max(cmid, cout), vmem_limit)
    if h % th:
        raise ValueError(f"row_tile {th} must divide H {h}")
    tile_elems = th * w

    def pick_fused_k(c_in):
        if conv_impl is not None:
            return conv_impl == "fused_k"
        return c_in < 16      # lane-concat im2col only pays off for very small Cin

    x = jnp.transpose(x_nchw, (0, 2, 3, 1)).astype(jnp.bfloat16)     # NCHW -> NHWC

    # ---- stage 1: conv1 (bias folded), per-tile BN1 partial stats --------------------
    fk1 = pick_fused_k(cin)
    z1, st1 = _conv_bn_stats_call(
        x, _prep_weight(w1, fk1),
        jnp.ones((1, cin), jnp.float32), jnp.zeros((1, cin), jnp.float32),
        row_tile=th, fuse_input_bn_act=False, negative_slope=leakyness,
        use_fused_k=fk1, vmem_limit=vmem_limit)
    scale1, shift1 = _finalize_bn(st1, g1, be1, tile_elems, eps)

    # ---- stage 2: (BN1 + LeakyReLU fused in-kernel) -> conv2, BN2 partial stats ------
    fk2 = pick_fused_k(cmid)
    z2, st2 = _conv_bn_stats_call(
        z1.reshape(n, h, w, cmid), _prep_weight(w2, fk2), scale1, shift1,
        row_tile=th, fuse_input_bn_act=True, negative_slope=leakyness,
        use_fused_k=fk2, vmem_limit=vmem_limit)
    scale2, shift2 = _finalize_bn(st2, g2, be2, tile_elems, eps)

    # ---- epilogue: BN2 + LeakyReLU on a lane-dense (N, H, W*C) view -------------------
    out = _bn_act_call(z2, scale2, shift2, h=h, w=w, cout=cout, row_tile=th,
                       negative_slope=leakyness, vmem_limit=vmem_limit)
    return jnp.transpose(out, (0, 3, 1, 2))                          # NHWC -> NCHW


# -------------------------------- pure-JAX reference ---------------------------------
def _ref_stage(x_nhwc, w_oihw, b, gamma, beta, slope, eps=1e-5):
    # Mirrors the module: conv(+bias) in bf16 inputs / f32 accum, batch-stat BN, leaky.
    w_hwio = jnp.transpose(w_oihw, (2, 3, 1, 0)).astype(jnp.bfloat16)
    y = jax.lax.conv_general_dilated(
        x_nhwc.astype(jnp.bfloat16), w_hwio, window_strides=(1, 1),
        padding=((1, 1), (1, 1)), dimension_numbers=("NHWC", "HWIO", "NHWC"),
        preferred_element_type=jnp.float32) + b
    mean = y.mean(axis=(0, 1, 2))
    var = ((y - mean) ** 2).mean(axis=(0, 1, 2))
    y = (y - mean) * jax.lax.rsqrt(var + eps) * gamma + beta
    return jnp.where(y >= 0, y, slope * y)


def _ref_double_conv(x_nchw, params, leakyness=0.0):
    x = jnp.transpose(x_nchw, (0, 2, 3, 1)).astype(jnp.float32)
    y = _ref_stage(x, params["w1"], params["b1"], params["g1"], params["be1"], leakyness)
    y = _ref_stage(y, params["w2"], params["b2"], params["g2"], params["be2"], leakyness)
    return jnp.transpose(y, (0, 3, 1, 2))


if __name__ == "__main__":
    key = jax.random.PRNGKey(0)
    N, Cin, H, W = 2, 4, 16, 16
    Cmid = Cout = 8                    # mid_channels defaults to out_channels

    k_x, k_w1, k_b1, k_w2, k_b2, k_g1, k_be1, k_g2, k_be2 = jax.random.split(key, 9)
    x = jax.random.normal(k_x, (N, Cin, H, W), jnp.float32)

    s1 = 1.0 / (Cin * 9.0) ** 0.5
    s2 = 1.0 / (Cmid * 9.0) ** 0.5
    params = {
        "w1": jax.random.uniform(k_w1, (Cmid, Cin, 3, 3), jnp.float32, -s1, s1),
        "b1": jax.random.uniform(k_b1, (Cmid,), jnp.float32, -s1, s1),
        "g1": jax.random.uniform(k_g1, (Cmid,), jnp.float32, 0.5, 1.5),
        "be1": 0.1 * jax.random.normal(k_be1, (Cmid,), jnp.float32),
        "w2": jax.random.uniform(k_w2, (Cout, Cmid, 3, 3), jnp.float32, -s2, s2),
        "b2": jax.random.uniform(k_b2, (Cout,), jnp.float32, -s2, s2),
        "g2": jax.random.uniform(k_g2, (Cout,), jnp.float32, 0.5, 1.5),
        "be2": 0.1 * jax.random.normal(k_be2, (Cout,), jnp.float32),
    }

    # Exercise: multi-row-tile grid (cross-tile Chan BN reduction), both conv
    # implementations, and the automatic row-tile chooser.
    cases = [
        dict(leakyness=0.0, row_tile=8, conv_impl=None),
        dict(leakyness=0.1, row_tile=8, conv_impl="multi"),
        dict(leakyness=0.1, row_tile=None, conv_impl="fused_k"),
    ]
    for cfg in cases:
        out = jax.block_until_ready(double_conv(x, params, **cfg))
        assert out.shape == (N, Cout, H, W), out.shape
        ref = jax.block_until_ready(_ref_double_conv(x, params, cfg["leakyness"]))
        err = float(jnp.max(jnp.abs(out - ref)))
        # bf16 intermediates (per the perf review) -> bf16-level tolerance.
        assert jnp.allclose(out, ref, atol=2e-2, rtol=2e-2), (cfg, err)

    print("KERNEL_OK")
</pallas_src>

<mosaic_0001>
module attributes {stable_mosaic.version = 11 : i64} {
  func.func @_conv3x3_stats_kernel(%arg0: i32, %arg1: i32, %arg2: memref<1x1x16x4xbf16, #tpu.memory_space<vmem>>, %arg3: memref<1x8x16x4xbf16, #tpu.memory_space<vmem>>, %arg4: memref<1x1x16x4xbf16, #tpu.memory_space<vmem>>, %arg5: memref<36x8xbf16, #tpu.memory_space<vmem>>, %arg6: memref<1x4xf32, #tpu.memory_space<vmem>>, %arg7: memref<1x4xf32, #tpu.memory_space<vmem>>, %arg8: memref<1x128x8xbf16, #tpu.memory_space<vmem>>, %arg9: memref<1x1x8x8xf32, #tpu.memory_space<vmem>>, %arg10: memref<10x18x4xbf16, #tpu.memory_space<vmem>>) attributes {dimension_semantics = [#tpu.dimension_semantics<parallel>, #tpu.dimension_semantics<parallel>], iteration_bounds = array<i64: 2, 2>, scalar_prefetch = 0 : i64, scratch_operands = 1 : i64, tpu.core_type = #tpu.core_type<tc>, window_params = [{transform_indices = @transform_0, window_bounds = array<i64: 1, 1, 16, 4>}, {transform_indices = @transform_1, window_bounds = array<i64: 1, 8, 16, 4>}, {transform_indices = @transform_2, window_bounds = array<i64: 1, 1, 16, 4>}, {pipeline_mode = #tpu.pipeline_mode<synchronous>, transform_indices = @transform_3, window_bounds = array<i64: 36, 8>}, {pipeline_mode = #tpu.pipeline_mode<synchronous>, transform_indices = @transform_4, window_bounds = array<i64: 1, 4>}, {pipeline_mode = #tpu.pipeline_mode<synchronous>, transform_indices = @transform_5, window_bounds = array<i64: 1, 4>}, {transform_indices = @transform_6, window_bounds = array<i64: 1, 128, 8>}, {transform_indices = @transform_7, window_bounds = array<i64: 1, 1, 8, 8>}]} {
    %c0_i32 = arith.constant 0 : i32
    %0 = arith.cmpi sgt, %arg1, %c0_i32 : i32
    %1 = arith.extui %0 : i1 to i32
    %2 = arith.sitofp %1 : i32 to f32
    %3 = arith.truncf %2 : f32 to bf16
    %c1_i32 = arith.constant 1 : i32
    %4 = arith.cmpi slt, %arg1, %c1_i32 : i32
    %5 = arith.extui %4 : i1 to i32
    %6 = arith.sitofp %5 : i32 to f32
    %7 = arith.truncf %6 : f32 to bf16
    %c0 = arith.constant 0 : index
    %c0_0 = arith.constant 0 : index
    %c0_1 = arith.constant 0 : index
    %c0_2 = arith.constant 0 : index
    %8 = vector.load %arg2[%c0, %c0_0, %c0_1, %c0_2] : memref<1x1x16x4xbf16, #tpu.memory_space<vmem>>, vector<1x1x16x4xbf16>
    %9 = vector.shape_cast %8 : vector<1x1x16x4xbf16> to vector<1x16x4xbf16>
    %10 = vector.broadcast %3 : bf16 to vector<1x16x4xbf16>
    %11 = arith.mulf %9, %10 : vector<1x16x4xbf16>
    %c0_3 = arith.constant 0 : index
    %c1 = arith.constant 1 : index
    %c0_4 = arith.constant 0 : index
    %12 = vector.load %arg10[%c0_3, %c1, %c0_4] : memref<10x18x4xbf16, #tpu.memory_space<vmem>>, vector<1x16x4xbf16>
    tpu.vector_store %arg10[%c0_3, %c1, %c0_4], %11 {strides = array<i32>} : memref<10x18x4xbf16, #tpu.memory_space<vmem>>, vector<1x16x4xbf16>,
    %c0_5 = arith.constant 0 : index
    %c0_6 = arith.constant 0 : index
    %c0_7 = arith.constant 0 : index
    %c0_8 = arith.constant 0 : index
    %13 = vector.load %arg3[%c0_5, %c0_6, %c0_7, %c0_8] : memref<1x8x16x4xbf16, #tpu.memory_space<vmem>>, vector<1x8x16x4xbf16>
    %14 = vector.shape_cast %13 : vector<1x8x16x4xbf16> to vector<8x16x4xbf16>
    %c1_9 = arith.constant 1 : index
    %c1_10 = arith.constant 1 : index
    %c0_11 = arith.constant 0 : index
    %15 = vector.load %arg10[%c1_9, %c1_10, %c0_11] : memref<10x18x4xbf16, #tpu.memory_space<vmem>>, vector<8x16x4xbf16>
    tpu.vector_store %arg10[%c1_9, %c1_10, %c0_11], %14 {strides = array<i32>} : memref<10x18x4xbf16, #tpu.memory_space<vmem>>, vector<8x16x4xbf16>,
    %c0_12 = arith.constant 0 : index
    %c0_13 = arith.constant 0 : index
    %c0_14 = arith.constant 0 : index
    %c0_15 = arith.constant 0 : index
    %16 = vector.load %arg4[%c0_12, %c0_13, %c0_14, %c0_15] : memref<1x1x16x4xbf16, #tpu.memory_space<vmem>>, vector<1x1x16x4xbf16>
    %17 = vector.shape_cast %16 : vector<1x1x16x4xbf16> to vector<1x16x4xbf16>
    %18 = vector.broadcast %7 : bf16 to vector<1x16x4xbf16>
    %19 = arith.mulf %17, %18 : vector<1x16x4xbf16>
    %c9 = arith.constant 9 : index
    %c1_16 = arith.constant 1 : index
    %c0_17 = arith.constant 0 : index
    %20 = vector.load %arg10[%c9, %c1_16, %c0_17] : memref<10x18x4xbf16, #tpu.memory_space<vmem>>, vector<1x16x4xbf16>
    tpu.vector_store %arg10[%c9, %c1_16, %c0_17], %19 {strides = array<i32>} : memref<10x18x4xbf16, #tpu.memory_space<vmem>>, vector<1x16x4xbf16>,
    %cst = arith.constant 0.000000e+00 : bf16
    %21 = vector.broadcast %cst : bf16 to vector<10x1x4xbf16>
    %c0_18 = arith.constant 0 : index
    %c0_19 = arith.constant 0 : index
    %c0_20 = arith.constant 0 : index
    %22 = vector.load %arg10[%c0_18, %c0_19, %c0_20] : memref<10x18x4xbf16, #tpu.memory_space<vmem>>, vector<10x1x4xbf16>
    tpu.vector_store %arg10[%c0_18, %c0_19, %c0_20], %21 {strides = array<i32>} : memref<10x18x4xbf16, #tpu.memory_space<vmem>>, vector<10x1x4xbf16>,
    %c0_21 = arith.constant 0 : index
    %c17 = arith.constant 17 : index
    %c0_22 = arith.constant 0 : index
    %23 = vector.load %arg10[%c0_21, %c17, %c0_22] : memref<10x18x4xbf16, #tpu.memory_space<vmem>>, vector<10x1x4xbf16>
    tpu.vector_store %arg10[%c0_21, %c17, %c0_22], %21 {strides = array<i32>} : memref<10x18x4xbf16, #tpu.memory_space<vmem>>, vector<10x1x4xbf16>,
    %c0_23 = arith.constant 0 : index
    %c0_24 = arith.constant 0 : index
    %c0_25 = arith.constant 0 : index
    %24 = vector.load %arg10[%c0_23, %c0_24, %c0_25] : memref<10x18x4xbf16, #tpu.memory_space<vmem>>, vector<8x16x4xbf16>
    %c0_26 = arith.constant 0 : index
    %c1_27 = arith.constant 1 : index
    %c0_28 = arith.constant 0 : index
    %25 = vector.load %arg10[%c0_26, %c1_27, %c0_28] : memref<10x18x4xbf16, #tpu.memory_space<vmem>>, vector<8x16x4xbf16>
    %c0_29 = arith.constant 0 : index
    %c2 = arith.constant 2 : index
    %c0_30 = arith.constant 0 : index
    %26 = vector.load %arg10[%c0_29, %c2, %c0_30] : memref<10x18x4xbf16, #tpu.memory_space<vmem>>, vector<8x16x4xbf16>
    %c1_31 = arith.constant 1 : index
    %c0_32 = arith.constant 0 : index
    %c0_33 = arith.constant 0 : index
    %27 = vector.load %arg10[%c1_31, %c0_32, %c0_33] : memref<10x18x4xbf16, #tpu.memory_space<vmem>>, vector<8x16x4xbf16>
    %c1_34 = arith.constant 1 : index
    %c1_35 = arith.constant 1 : index
    %c0_36 = arith.constant 0 : index
    %28 = vector.load %arg10[%c1_34, %c1_35, %c0_36] : memref<10x18x4xbf16, #tpu.memory_space<vmem>>, vector<8x16x4xbf16>
    %c1_37 = arith.constant 1 : index
    %c2_38 = arith.constant 2 : index
    %c0_39 = arith.constant 0 : index
    %29 = vector.load %arg10[%c1_37, %c2_38, %c0_39] : memref<10x18x4xbf16, #tpu.memory_space<vmem>>, vector<8x16x4xbf16>
    %c2_40 = arith.constant 2 : index
    %c0_41 = arith.constant 0 : index
    %c0_42 = arith.constant 0 : index
    %30 = vector.load %arg10[%c2_40, %c0_41, %c0_42] : memref<10x18x4xbf16, #tpu.memory_space<vmem>>, vector<8x16x4xbf16>
    %c2_43 = arith.constant 2 : index
    %c1_44 = arith.constant 1 : index
    %c0_45 = arith.constant 0 : index
    %31 = vector.load %arg10[%c2_43, %c1_44, %c0_45] : memref<10x18x4xbf16, #tpu.memory_space<vmem>>, vector<8x16x4xbf16>
    %c2_46 = arith.constant 2 : index
    %c2_47 = arith.constant 2 : index
    %c0_48 = arith.constant 0 : index
    %32 = vector.load %arg10[%c2_46, %c2_47, %c0_48] : memref<10x18x4xbf16, #tpu.memory_space<vmem>>, vector<8x16x4xbf16>
    %33 = tpu.concatenate %24, %25, %26, %27, %28, %29, %30, %31, %32 in 2 : vector<8x16x4xbf16>, vector<8x16x4xbf16>, vector<8x16x4xbf16>, vector<8x16x4xbf16>, vector<8x16x4xbf16>, vector<8x16x4xbf16>, vector<8x16x4xbf16>, vector<8x16x4xbf16>, vector<8x16x4xbf16> -> vector<8x16x36xbf16>
    %34 = vector.shape_cast %33 : vector<8x16x36xbf16> to vector<128x36xbf16>
    %c0_49 = arith.constant 0 : index
    %c0_50 = arith.constant 0 : index
    %35 = vector.load %arg5[%c0_49, %c0_50] : memref<36x8xbf16, #tpu.memory_space<vmem>>, vector<36x8xbf16>
    %cst_51 = arith.constant dense<0.000000e+00> : vector<128x8xf32>
    %36 = tpu.matmul %34, %35, %cst_51 {dimension_numbers = #tpu.dot_dimension_numbers<[1], [0], [0], [1], [0, 0, 1, 1], [], []>} : vector<128x36xbf16>, vector<36x8xbf16>, vector<128x8xf32> -> vector<128x8xf32>
    %37 = arith.truncf %36 : vector<128x8xf32> to vector<128x8xbf16>
    %c0_52 = arith.constant 0 : index
    %c0_53 = arith.constant 0 : index
    %c0_54 = arith.constant 0 : index
    %38 = vector.load %arg8[%c0_52, %c0_53, %c0_54] : memref<1x128x8xbf16, #tpu.memory_space<vmem>>, vector<1x128x8xbf16>
    %39 = vector.shape_cast %38 : vector<1x128x8xbf16> to vector<128x8xbf16>
    %40 = vector.shape_cast %37 : vector<128x8xbf16> to vector<1x128x8xbf16>
    tpu.vector_store %arg8[%c0_52, %c0_53, %c0_54], %40 {strides = array<i32>} : memref<1x128x8xbf16, #tpu.memory_space<vmem>>, vector<1x128x8xbf16>,
    %cst_55 = arith.constant dense<0.000000e+00> : vector<8xf32>
    %41 = vector.multi_reduction <add>, %36, %cst_55 [0] : vector<128x8xf32> to vector<8xf32>
    %42 = vector.shape_cast %41 : vector<8xf32> to vector<1x8xf32>
    %cst_56 = arith.constant 7.812500e-03 : f32
    %43 = vector.broadcast %cst_56 : f32 to vector<1x8xf32>
    %44 = arith.mulf %42, %43 : vector<1x8xf32>
    %45 = vector.broadcast %44 : vector<1x8xf32> to vector<128x8xf32>
    %46 = arith.subf %36, %45 : vector<128x8xf32>
    %47 = arith.mulf %46, %46 : vector<128x8xf32>
    %cst_57 = arith.constant dense<0.000000e+00> : vector<8xf32>
    %48 = vector.multi_reduction <add>, %47, %cst_57 [0] : vector<128x8xf32> to vector<8xf32>
    %49 = vector.shape_cast %48 : vector<8xf32> to vector<1x8xf32>
    %cst_58 = arith.constant 0.000000e+00 : f32
    %50 = vector.broadcast %cst_58 : f32 to vector<6x8xf32>
    %51 = tpu.concatenate %44, %49, %50 in 0 : vector<1x8xf32>, vector<1x8xf32>, vector<6x8xf32> -> vector<8x8xf32>
    %c0_59 = arith.constant 0 : index
    %c0_60 = arith.constant 0 : index
    %c0_61 = arith.constant 0 : index
    %c0_62 = arith.constant 0 : index
    %52 = vector.load %arg9[%c0_59, %c0_60, %c0_61, %c0_62] : memref<1x1x8x8xf32, #tpu.memory_space<vmem>>, vector<1x1x8x8xf32>
    %53 = vector.shape_cast %52 : vector<1x1x8x8xf32> to vector<8x8xf32>
    %54 = vector.shape_cast %51 : vector<8x8xf32> to vector<1x1x8x8xf32>
    tpu.vector_store %arg9[%c0_59, %c0_60, %c0_61, %c0_62], %54 {strides = array<i32>} : memref<1x1x8x8xf32, #tpu.memory_space<vmem>>, vector<1x1x8x8xf32>,
    return
  }
  func.func @transform_0(%arg0: i32, %arg1: i32) -> (i32, i32, i32, i32) {
    %c8_i32 = arith.constant 8 : i32
    %0 = arith.muli %arg1, %c8_i32 : i32
    %c1_i32 = arith.constant 1 : i32
    %1 = arith.subi %0, %c1_i32 : i32
    %c0_i32 = arith.constant 0 : i32
    %2 = arith.maxsi %1, %c0_i32 : i32
    %c0_i32_0 = arith.constant 0 : i32
    %c0_i32_1 = arith.constant 0 : i32
    %c0_i32_2 = arith.constant 0 : i32
    return %arg0, %2, %c0_i32_0, %c0_i32_1 : i32, i32, i32, i32
  }
  func.func @transform_1(%arg0: i32, %arg1: i32) -> (i32, i32, i32, i32) {
    %c0_i32 = arith.constant 0 : i32
    %c0_i32_0 = arith.constant 0 : i32
    %c0_i32_1 = arith.constant 0 : i32
    return %arg0, %arg1, %c0_i32, %c0_i32_0 : i32, i32, i32, i32
  }
  func.func @transform_2(%arg0: i32, %arg1: i32) -> (i32, i32, i32, i32) {
    %c8_i32 = arith.constant 8 : i32
    %0 = arith.muli %arg1, %c8_i32 : i32
    %c8_i32_0 = arith.constant 8 : i32
    %1 = arith.addi %0, %c8_i32_0 : i32
    %c15_i32 = arith.constant 15 : i32
    %2 = arith.minsi %1, %c15_i32 : i32
    %c0_i32 = arith.constant 0 : i32
    %c0_i32_1 = arith.constant 0 : i32
    %c0_i32_2 = arith.constant 0 : i32
    return %arg0, %2, %c0_i32, %c0_i32_1 : i32, i32, i32, i32
  }
  func.func @transform_3(%arg0: i32, %arg1: i32) -> (i32, i32) {
    %c0_i32 = arith.constant 0 : i32
    %c0_i32_0 = arith.constant 0 : i32
    %c0_i32_1 = arith.constant 0 : i32
    return %c0_i32, %c0_i32_0 : i32, i32
  }
  func.func @transform_4(%arg0: i32, %arg1: i32) -> (i32, i32) {
    %c0_i32 = arith.constant 0 : i32
    %c0_i32_0 = arith.constant 0 : i32
    %c0_i32_1 = arith.constant 0 : i32
    return %c0_i32, %c0_i32_0 : i32, i32
  }
  func.func @transform_5(%arg0: i32, %arg1: i32) -> (i32, i32) {
    %c0_i32 = arith.constant 0 : i32
    %c0_i32_0 = arith.constant 0 : i32
    %c0_i32_1 = arith.constant 0 : i32
    return %c0_i32, %c0_i32_0 : i32, i32
  }
  func.func @transform_6(%arg0: i32, %arg1: i32) -> (i32, i32, i32) {
    %c0_i32 = arith.constant 0 : i32
    %c0_i32_0 = arith.constant 0 : i32
    return %arg0, %arg1, %c0_i32 : i32, i32, i32
  }
  func.func @transform_7(%arg0: i32, %arg1: i32) -> (i32, i32, i32, i32) {
    %c0_i32 = arith.constant 0 : i32
    %c0_i32_0 = arith.constant 0 : i32
    %c0_i32_1 = arith.constant 0 : i32
    return %arg0, %arg1, %c0_i32, %c0_i32_0 : i32, i32, i32, i32
  }
}

</mosaic_0001>

<llo_original>
// kernel: tpu_custom_call.1
$region0: #{tpu_custom_call.1}
  #allocation0 [shape = 'u32[]', space=smem, size = 0x4, offset = 0x4, fixed_abs, tag = 'smem constant byte address 0x4 - core index']
  #allocation1 [shape = 'u32[144,128]{1,0:T(1,128)}', space=vmem, size = 0x12000, scoped, tag = 'internal scratch']
  #allocation2 [shape = 'bf16[10,18,4]{2,1,0:T(8,128)(2,1)}', space=vmem, size = 0xf000, scoped, tag = 'scratch operand']
  %s0 = inlined_call_operand.vmem [shape: bf16[2,16,16,4], index: 0, kind: input, shape index: {}]
  %s1 = inlined_call_operand.vmem [shape: bf16[2,16,16,4], index: 1, kind: input, shape index: {}]
  %s2 = inlined_call_operand.vmem [shape: bf16[2,16,16,4], index: 2, kind: input, shape index: {}]
  %s3 = inlined_call_operand.vmem [shape: bf16[36,8], index: 3, kind: input, shape index: {}]
  %s4 = inlined_call_operand.vmem [shape: f32[1,4], index: 4, kind: input, shape index: {}]
  %s5 = inlined_call_operand.vmem [shape: f32[1,4], index: 5, kind: input, shape index: {}]
  %s6 = inlined_call_operand.vmem [shape: bf16[2,256,8], index: 6, kind: output, shape index: {0}]
  %s7 = inlined_call_operand.hbm [shape: f32[2,2,8,8], index: 7, kind: output, shape index: {1}]
  %8 = xla_tuple %s6, %s7
  %s9 = sld [smem:[#allocation0]]
  $region65: #{tpu_custom_call.1} parent=0
    _
  %s11 = ssub.s32 1, %s9
  %s12 = scalar_select 0, %s11, %s9
  $region1: #{tpu_custom_call.1} parent=0
    #allocation3 [shape = 'u8[8192]{0}', space=vmem, size = 0x2000, scoped, tag = 'output window, operand 1']
    #allocation4 [shape = 's32[2]{0}', space=sflag, size = 0x8, scoped, tag = 'scoped memory for tpu_custom_call.1']
    %13 = vsyncpa [#allocation4], 0
    %s14 = scalar_lea.sflag [#allocation4], 1
    %15 = vsyncpa %s14, 0
    loop: start=0, step=1, limit=6
    $region2: #{tpu_custom_call.1} parent=1 // loop_pre_header
      _
    $region3: #{tpu_custom_call.1} parent=1 // loop_header
      %s17 = sphi 0, %s21
      %p18 = scmp.ge.s32.totalorder %s17, 6
      %s24 = sphi 0, %s36
      %s25 = sphi 0, %s32
      %s26 = sphi 0, %s24
      %s27 = sphi 0, %s25
      %s28 = sphi 0, %s26
      %s29 = sphi 0, %s27
      %s49 = sphi 0, %s51
      %s52 = sphi 0, %s49
      %s53 = sphi 0, %s52
      %s69 = sphi 0, %s53
      %s77 = sphi 0, %s79
      %s80 = sphi 0, %s77
      %s81 = sphi 0, %s80
      %s97 = sphi 0, %s81
      %s113 = sphi 0, %s115
      %s116 = sphi 0, %s113
      %s117 = sphi 0, %s116
      %s133 = sphi 0, %s117
      %s137 = sphi 0, %s137
      %s139 = sphi 0, %s137
      %s140 = sphi 0, %s139
      %s154 = sphi 0, %s140
      %s158 = sphi 0, %s158
      %s160 = sphi 0, %s158
      %s161 = sphi 0, %s160
      %s175 = sphi 0, %s161
      %s179 = sphi 0, %s179
      %s181 = sphi 0, %s179
      %s182 = sphi 0, %s181
      %s196 = sphi 0, %s182
      %s204 = sphi 0, %s206
      %s207 = sphi 0, %s204
      %s208 = sphi 0, %s207
      %s224 = sphi 0, %s208
      %s232 = sphi 0, %s234
      %s235 = sphi 0, %s232
      %s236 = sphi 0, %s235
      %s252 = sphi 0, %s236
    $region4: #{tpu_custom_call.1} parent=1 // loop_header_branch
      %20 = sbr.rel (%p18) target = $region8
    $region5: #{tpu_custom_call.1} parent=1 // loop_body
      %s22 = ssub.s32 %s17, 1
      %s23 = ssub.s32 %s17, 2
      %s30 = sadd.s32 1, %s25
      %p31 = scmp.ge.s32.totalorder %s30, 2
      %s32 = scalar_select %p31, 0, %s30
      %s33 = sadd.s32 1, %s24
      %s34 = scalar_select %p31, %s33, %s24
      %p35 = scmp.ge.s32.totalorder %s34, 2
      %s36 = scalar_select %p35, 0, %s34
      %s37 = smul.u32 %s25, 8
      %s38 = ssub.s32 %s37, 1
      %p39 = scmp.gt.s32.totalorder %s38, 0
      %s40 = scalar_select %p39, %s38, 0
      %s41 = smul.u32 %s32, 8
      %s42 = ssub.s32 %s41, 1
      %p43 = scmp.gt.s32.totalorder %s42, 0
      %s44 = scalar_select %p43, %s42, 0
      %s45 = ssub.s32 %s24, %s36
      %s46 = ssub.s32 %s40, %s44
      %s47 = sor.u32 %s45, %s46
      %p48 = scmp.eq.s32.totalorder %s47, 0
      %s50 = sadd.s32 %s49, 1
      %s51 = scalar_select %p48, %s49, %s50
      %p54 = pneg %p48
      %p55 = scmp.eq.s32.totalorder %s17, 3
      %p56 = por %p54, %p55
      %p57 = scmp.ne.s32.totalorder %s49, %s52
      %p58 = scmp.eq.s32.totalorder %s17, 0
      %p59 = por %p57, %p58
      %p60 = scmp.ne.s32.totalorder %s49, %s52
      %p61 = scmp.eq.s32.totalorder %s22, 3
      %p62 = por %p60, %p61
      %p63 = scmp.ne.s32.totalorder %s52, %s53
      %p64 = scmp.eq.s32.totalorder %s22, 0
      %p65 = por %p63, %p64
      %p66 = scmp.ne.s32.totalorder %s52, %s53
      %p67 = scmp.eq.s32.totalorder %s23, 3
      %p68 = por %p66, %p67
      %p70 = scmp.ne.s32.totalorder %s53, %s69
      %p71 = scmp.eq.s32.totalorder %s23, 0
      %p72 = por %p70, %p71
      %s73 = ssub.s32 %s24, %s36
      %s74 = ssub.s32 %s25, %s32
      %s75 = sor.u32 %s73, %s74
      %p76 = scmp.eq.s32.totalorder %s75, 0
      %s78 = sadd.s32 %s77, 1
      %s79 = scalar_select %p76, %s77, %s78
      %p82 = pneg %p76
      %p83 = scmp.eq.s32.totalorder %s17, 3
      %p84 = por %p82, %p83
      %p85 = scmp.ne.s32.totalorder %s77, %s80
      %p86 = scmp.eq.s32.totalorder %s17, 0
      %p87 = por %p85, %p86
      %p88 = scmp.ne.s32.totalorder %s77, %s80
      %p89 = scmp.eq.s32.totalorder %s22, 3
      %p90 = por %p88, %p89
      %p91 = scmp.ne.s32.totalorder %s80, %s81
      %p92 = scmp.eq.s32.totalorder %s22, 0
      %p93 = por %p91, %p92
      %p94 = scmp.ne.s32.totalorder %s80, %s81
      %p95 = scmp.eq.s32.totalorder %s23, 3
      %p96 = por %p94, %p95
      %p98 = scmp.ne.s32.totalorder %s81, %s97
      %p99 = scmp.eq.s32.totalorder %s23, 0
      %p100 = por %p98, %p99
      %s101 = smul.u32 %s25, 8
      %s102 = sadd.s32 %s101, 8
      %p103 = scmp.lt.s32.totalorder %s102, 15
      %s104 = scalar_select %p103, %s102, 15
      %s105 = smul.u32 %s32, 8
      %s106 = sadd.s32 %s105, 8
      %p107 = scmp.lt.s32.totalorder %s106, 15
      %s108 = scalar_select %p107, %s106, 15
      %s109 = ssub.s32 %s24, %s36
      %s110 = ssub.s32 %s104, %s108
      %s111 = sor.u32 %s109, %s110
      %p112 = scmp.eq.s32.totalorder %s111, 0
      %s114 = sadd.s32 %s113, 1
      %s115 = scalar_select %p112, %s113, %s114
      %p118 = pneg %p112
      %p119 = scmp.eq.s32.totalorder %s17, 3
      %p120 = por %p118, %p119
      %p121 = scmp.ne.s32.totalorder %s113, %s116
      %p122 = scmp.eq.s32.totalorder %s17, 0
      %p123 = por %p121, %p122
      %p124 = scmp.ne.s32.totalorder %s113, %s116
      %p125 = scmp.eq.s32.totalorder %s22, 3
      %p126 = por %p124, %p125
      %p127 = scmp.ne.s32.totalorder %s116, %s117
      %p128 = scmp.eq.s32.totalorder %s22, 0
      %p129 = por %p127, %p128
      %p130 = scmp.ne.s32.totalorder %s116, %s117
      %p131 = scmp.eq.s32.totalorder %s23, 3
      %p132 = por %p130, %p131
      %p134 = scmp.ne.s32.totalorder %s117, %s133
      %p135 = scmp.eq.s32.totalorder %s23, 0
      %p136 = por %p134, %p135
      %s138 = sadd.s32 %s137, 1
      %p141 = scmp.eq.s32.totalorder %s17, 3
      %p142 = scmp.ne.s32.totalorder %s137, %s139
      %p143 = scmp.eq.s32.totalorder %s17, 0
      %p144 = por %p142, %p143
      %p145 = scmp.ne.s32.totalorder %s137, %s139
      %p146 = scmp.eq.s32.totalorder %s22, 3
      %p147 = por %p145, %p146
      %p148 = scmp.ne.s32.totalorder %s139, %s140
      %p149 = scmp.eq.s32.totalorder %s22, 0
      %p150 = por %p148, %p149
      %p151 = scmp.ne.s32.totalorder %s139, %s140
      %p152 = scmp.eq.s32.totalorder %s23, 3
      %p153 = por %p151, %p152
      %p155 = scmp.ne.s32.totalorder %s140, %s154
      %p156 = scmp.eq.s32.totalorder %s23, 0
      %p157 = por %p155, %p156
      %s159 = sadd.s32 %s158, 1
      %p162 = scmp.eq.s32.totalorder %s17, 3
      %p163 = scmp.ne.s32.totalorder %s158, %s160
      %p164 = scmp.eq.s32.totalorder %s17, 0
      %p165 = por %p163, %p164
      %p166 = scmp.ne.s32.totalorder %s158, %s160
      %p167 = scmp.eq.s32.totalorder %s22, 3
      %p168 = por %p166, %p167
      %p169 = scmp.ne.s32.totalorder %s160, %s161
      %p170 = scmp.eq.s32.totalorder %s22, 0
      %p171 = por %p169, %p170
      %p172 = scmp.ne.s32.totalorder %s160, %s161
      %p173 = scmp.eq.s32.totalorder %s23, 3
      %p174 = por %p172, %p173
      %p176 = scmp.ne.s32.totalorder %s161, %s175
      %p177 = scmp.eq.s32.totalorder %s23, 0
      %p178 = por %p176, %p177
      %s180 = sadd.s32 %s179, 1
      %p183 = scmp.eq.s32.totalorder %s17, 3
      %p184 = scmp.ne.s32.totalorder %s179, %s181
      %p185 = scmp.eq.s32.totalorder %s17, 0
      %p186 = por %p184, %p185
      %p187 = scmp.ne.s32.totalorder %s179, %s181
      %p188 = scmp.eq.s32.totalorder %s22, 3
      %p189 = por %p187, %p188
      %p190 = scmp.ne.s32.totalorder %s181, %s182
      %p191 = scmp.eq.s32.totalorder %s22, 0
      %p192 = por %p190, %p191
      %p193 = scmp.ne.s32.totalorder %s181, %s182
      %p194 = scmp.eq.s32.totalorder %s23, 3
      %p195 = por %p193, %p194
      %p197 = scmp.ne.s32.totalorder %s182, %s196
      %p198 = scmp.eq.s32.totalorder %s23, 0
      %p199 = por %p197, %p198
      %s200 = ssub.s32 %s24, %s36
      %s201 = ssub.s32 %s25, %s32
      %s202 = sor.u32 %s200, %s201
      %p203 = scmp.eq.s32.totalorder %s202, 0
      %s205 = sadd.s32 %s204, 1
      %s206 = scalar_select %p203, %s204, %s205
      %p209 = pneg %p203
      %p210 = scmp.eq.s32.totalorder %s17, 3
      %p211 = por %p209, %p210
      %p212 = scmp.ne.s32.totalorder %s204, %s207
      %p213 = scmp.eq.s32.totalorder %s17, 0
      %p214 = por %p212, %p213
      %p215 = scmp.ne.s32.totalorder %s204, %s207
      %p216 = scmp.eq.s32.totalorder %s22, 3
      %p217 = por %p215, %p216
      %p218 = scmp.ne.s32.totalorder %s207, %s208
      %p219 = scmp.eq.s32.totalorder %s22, 0
      %p220 = por %p218, %p219
      %p221 = scmp.ne.s32.totalorder %s207, %s208
      %p222 = scmp.eq.s32.totalorder %s23, 3
      %p223 = por %p221, %p222
      %p225 = scmp.ne.s32.totalorder %s208, %s224
      %p226 = scmp.eq.s32.totalorder %s23, 0
      %p227 = por %p225, %p226
      %s228 = ssub.s32 %s24, %s36
      %s229 = ssub.s32 %s25, %s32
      %s230 = sor.u32 %s228, %s229
      %p231 = scmp.eq.s32.totalorder %s230, 0
      %s233 = sadd.s32 %s232, 1
      %s234 = scalar_select %p231, %s232, %s233
      %p237 = pneg %p231
      %p238 = scmp.eq.s32.totalorder %s17, 3
      %p239 = por %p237, %p238
      %p240 = scmp.ne.s32.totalorder %s232, %s235
      %p241 = scmp.eq.s32.totalorder %s17, 0
      %p242 = por %p240, %p241
      %p243 = scmp.ne.s32.totalorder %s232, %s235
      %p244 = scmp.eq.s32.totalorder %s22, 3
      %p245 = por %p243, %p244
      %p246 = scmp.ne.s32.totalorder %s235, %s236
      %p247 = scmp.eq.s32.totalorder %s22, 0
      %p248 = por %p246, %p247
      %p249 = scmp.ne.s32.totalorder %s235, %s236
      %p250 = scmp.eq.s32.totalorder %s23, 3
      %p251 = por %p249, %p250
      %p253 = scmp.ne.s32.totalorder %s236, %s252
      %p254 = scmp.eq.s32.totalorder %s23, 0
      %p255 = por %p253, %p254
      %p256 = scmp.le.s32.totalorder 1, %s17
      %p257 = scmp.lt.s32.totalorder %s17, 5
      %p258 = pnand %p256, %p257
      %p259 = pneg %p258
      // Predicated region
      $region9: #{tpu_custom_call.1} parent=5 // pred_check
        _
      $region10: #{tpu_custom_call.1} parent=5 // pred_check_branch
        %261 = sbr.rel (%p258) target = $region12
      $region11: #{tpu_custom_call.1} parent=5 // pred_region
        %s262 = ssub.s32 %s17, 1
        // Predicated region
        $region13: #{tpu_custom_call.1} parent=11 // pred_check
          %p263 = pneg %p150
        $region14: #{tpu_custom_call.1} parent=11 // pred_check_branch
          %265 = sbr.rel (%p263) target = $region16
        $region15: #{tpu_custom_call.1} parent=11 // pred_region
          _
        $region16: #{tpu_custom_call.1} parent=11 // pred_fallthru
          _
        // Predicated region
        $region17: #{tpu_custom_call.1} parent=11 // pred_check
          %p266 = pneg %p171
        $region18: #{tpu_custom_call.1} parent=11 // pred_check_branch
          %268 = sbr.rel (%p266) target = $region20
        $region19: #{tpu_custom_call.1} parent=11 // pred_region
          _
        $region20: #{tpu_custom_call.1} parent=11 // pred_fallthru
          _
        // Predicated region
        $region21: #{tpu_custom_call.1} parent=11 // pred_check
          %p269 = pneg %p192
        $region22: #{tpu_custom_call.1} parent=11 // pred_check_branch
          %271 = sbr.rel (%p269) target = $region24
        $region23: #{tpu_custom_call.1} parent=11 // pred_region
          _
        $region24: #{tpu_custom_call.1} parent=11 // pred_fallthru
          _
      $region12: #{tpu_custom_call.1} parent=5 // pred_fallthru
        _
      %p272 = scmp.lt.s32.totalorder %s17, 4
      // Predicated region
      $region25: #{tpu_custom_call.1} parent=5 // pred_check
        %p273 = pneg %p272
      $region26: #{tpu_custom_call.1} parent=5 // pred_check_branch
        %275 = sbr.rel (%p273) target = $region28
      $region27: #{tpu_custom_call.1} parent=5 // pred_region
        // Predicated region
        $region29: #{tpu_custom_call.1} parent=27 // pred_check
          %p276 = pneg %p59
        $region30: #{tpu_custom_call.1} parent=27 // pred_check_branch
          %278 = sbr.rel (%p276) target = $region32
        $region31: #{tpu_custom_call.1} parent=27 // pred_region
          %s279 = smul.u32 %s25, 8
          %s280 = ssub.s32 %s279, 1
          %p281 = scmp.gt.s32.totalorder %s280, 0
          %s282 = scalar_select %p281, %s280, 0
          %p283 = scmp.lt.s32.totalorder %s24, 1
          %s284 = scalar_select %p283, %s24, 1
          %p285 = scmp.lt.s32.totalorder %s282, 15
          %s286 = scalar_select %p285, %s282, 15
          %s287 = smul.addr %s286, 2
          %s288 = smul.addr %s284, 32
          %s289 = sadd.s32 %s287, %s288
          %s290 = smul.addr %s289, 4
          %s291 = scalar_lea.vmem %s0, %s290
          %s292 = smul.u32 %s25, 8
          %s293 = ssub.s32 %s292, 1
          %p294 = scmp.gt.s32.totalorder %s293, 0
          %s295 = scalar_select %p294, %s293, 0
        $region32: #{tpu_custom_call.1} parent=27 // pred_fallthru
          _
        // Predicated region
        $region33: #{tpu_custom_call.1} parent=27 // pred_check
          %p296 = pneg %p87
        $region34: #{tpu_custom_call.1} parent=27 // pred_check_branch
          %298 = sbr.rel (%p296) target = $region36
        $region35: #{tpu_custom_call.1} parent=27 // pred_region
          %s299 = smul.u32 8, %s25
          %p300 = scmp.lt.s32.totalorder %s24, 1
          %s301 = scalar_select %p300, %s24, 1
          %p302 = scmp.lt.s32.totalorder %s299, 15
          %s303 = scalar_select %p302, %s299, 15
          %s304 = smul.addr %s303, 2
          %s305 = smul.addr %s301, 32
          %s306 = sadd.s32 %s304, %s305
          %s307 = smul.addr %s306, 4
          %s308 = scalar_lea.vmem %s1, %s307
          %s309 = smul.u32 8, %s25
        $region36: #{tpu_custom_call.1} parent=27 // pred_fallthru
          _
        // Predicated region
        $region37: #{tpu_custom_call.1} parent=27 // pred_check
          %p310 = pneg %p123
        $region38: #{tpu_custom_call.1} parent=27 // pred_check_branch
          %312 = sbr.rel (%p310) target = $region40
        $region39: #{tpu_custom_call.1} parent=27 // pred_region
          %s313 = smul.u32 %s25, 8
          %s314 = sadd.s32 %s313, 8
          %p315 = scmp.lt.s32.totalorder %s314, 15
          %s316 = scalar_select %p315, %s314, 15
          %p317 = scmp.lt.s32.totalorder %s24, 1
          %s318 = scalar_select %p317, %s24, 1
          %p319 = scmp.lt.s32.totalorder %s316, 15
          %s320 = scalar_select %p319, %s316, 15
          %s321 = smul.addr %s320, 2
          %s322 = smul.addr %s318, 32
          %s323 = sadd.s32 %s321, %s322
          %s324 = smul.addr %s323, 4
          %s325 = scalar_lea.vmem %s2, %s324
          %s326 = smul.u32 %s25, 8
          %s327 = sadd.s32 %s326, 8
          %p328 = scmp.lt.s32.totalorder %s327, 15
          %s329 = scalar_select %p328, %s327, 15
        $region40: #{tpu_custom_call.1} parent=27 // pred_fallthru
          _
      $region28: #{tpu_custom_call.1} parent=5 // pred_fallthru
        _
      %p330 = scmp.le.s32.totalorder 1, %s17
      %p331 = scmp.lt.s32.totalorder %s17, 5
      %p332 = pnand %p330, %p331
      %p333 = pneg %p332
      // Predicated region
      $region41: #{tpu_custom_call.1} parent=5 // pred_check
        _
      $region42: #{tpu_custom_call.1} parent=5 // pred_check_branch
        %335 = sbr.rel (%p332) target = $region44
      $region43: #{tpu_custom_call.1} parent=5 // pred_region
        %s336 = ssub.s32 %s17, 1
        %s337 = smul.u32 %s27, 8
        %s338 = ssub.s32 %s337, 1
        %p339 = scmp.gt.s32.totalorder %s338, 0
        %s340 = scalar_select %p339, %s338, 0
        %p341 = scmp.lt.s32.totalorder %s26, 1
        %s342 = scalar_select %p341, %s26, 1
        %p343 = scmp.lt.s32.totalorder %s340, 15
        %s344 = scalar_select %p343, %s340, 15
        %s345 = smul.addr %s344, 2
        %s346 = smul.addr %s342, 32
        %s347 = sadd.s32 %s345, %s346
        %s348 = smul.addr %s347, 4
        %s349 = scalar_lea.vmem %s0, %s348
        %p350 = pneg %p65
        %p351 = pneg %p62
        %s352 = smul.u32 8, %s27
        %p353 = scmp.lt.s32.totalorder %s26, 1
        %s354 = scalar_select %p353, %s26, 1
        %p355 = scmp.lt.s32.totalorder %s352, 15
        %s356 = scalar_select %p355, %s352, 15
        %s357 = smul.addr %s356, 2
        %s358 = smul.addr %s354, 32
        %s359 = sadd.s32 %s357, %s358
        %s360 = smul.addr %s359, 4
        %s361 = scalar_lea.vmem %s1, %s360
        %p362 = pneg %p93
        %p363 = pneg %p90
        %s364 = smul.u32 %s27, 8
        %s365 = sadd.s32 %s364, 8
        %p366 = scmp.lt.s32.totalorder %s365, 15
        %s367 = scalar_select %p366, %s365, 15
        %p368 = scmp.lt.s32.totalorder %s26, 1
        %s369 = scalar_select %p368, %s26, 1
        %p370 = scmp.lt.s32.totalorder %s367, 15
        %s371 = scalar_select %p370, %s367, 15
        %s372 = smul.addr %s371, 2
        %s373 = smul.addr %s369, 32
        %s374 = sadd.s32 %s372, %s373
        %s375 = smul.addr %s374, 4
        %s376 = scalar_lea.vmem %s2, %s375
        %p377 = pneg %p129
        %p378 = pneg %p126
        %p379 = pneg %p150
        %p380 = pneg %p147
        %p381 = pneg %p171
        %p382 = pneg %p168
        %p383 = pneg %p192
        %p384 = pneg %p189
        %p385 = pneg %p220
        %p386 = pneg %p217
        %s387 = smul.u32 16, %s27
        %p388 = scmp.lt.s32.totalorder %s26, 1
        %s389 = scalar_select %p388, %s26, 1
        %p390 = scmp.lt.s32.totalorder %s387, 31
        %s391 = scalar_select %p390, %s387, 31
        %s392 = smul.addr %s389, 32
        %s393 = sadd.s32 %s391, %s392
        %s394 = smul.addr %s393, 4
        %s395 = scalar_lea.vmem %s6, %s394
        %p396 = pneg %p248
        %p397 = pneg %p245
        %s398 = sand.u32 %s235, 1
        %s399 = scalar_lea.sflag [#allocation4], %s398
        %s400 = sand.u32 %s235, 1
        %s401 = smul.addr %s400, 8
        %s402 = scalar_lea.vmem [#allocation3], %s401
        %s403 = smul.u32 %s27, 8
        %s404 = ssub.s32 %s403, 1
        %p405 = scmp.gt.s32.totalorder %s404, 0
        %s406 = scalar_select %p405, %s404, 0
        %p407 = scmp.lt.s32.totalorder %s26, 1
        %s408 = scalar_select %p407, %s26, 1
        %p409 = scmp.lt.s32.totalorder %s406, 15
        %s410 = scalar_select %p409, %s406, 15
        %s411 = smul.addr %s410, 2
        %s412 = smul.addr %s408, 32
        %s413 = sadd.s32 %s411, %s412
        %s414 = smul.addr %s413, 4
        %s415 = scalar_lea.vmem %s0, %s414
        %s416 = smul.u32 %s27, 8
        %s417 = ssub.s32 %s416, 1
        %p418 = scmp.gt.s32.totalorder %s417, 0
        %s419 = scalar_select %p418, %s417, 0
        %s420 = smul.u32 8, %s27
        %p421 = scmp.lt.s32.totalorder %s26, 1
        %s422 = scalar_select %p421, %s26, 1
        %p423 = scmp.lt.s32.totalorder %s420, 15
        %s424 = scalar_select %p423, %s420, 15
        %s425 = smul.addr %s424, 2
        %s426 = smul.addr %s422, 32
        %s427 = sadd.s32 %s425, %s426
        %s428 = smul.addr %s427, 4
        %s429 = scalar_lea.vmem %s1, %s428
        %s430 = smul.u32 8, %s27
        %s431 = smul.u32 %s27, 8
        %s432 = sadd.s32 %s431, 8
        %p433 = scmp.lt.s32.totalorder %s432, 15
        %s434 = scalar_select %p433, %s432, 15
        %p435 = scmp.lt.s32.totalorder %s26, 1
        %s436 = scalar_select %p435, %s26, 1
        %p437 = scmp.lt.s32.totalorder %s434, 15
        %s438 = scalar_select %p437, %s434, 15
        %s439 = smul.addr %s438, 2
        %s440 = smul.addr %s436, 32
        %s441 = sadd.s32 %s439, %s440
        %s442 = smul.addr %s441, 4
        %s443 = scalar_lea.vmem %s2, %s442
        %s444 = smul.u32 %s27, 8
        %s445 = sadd.s32 %s444, 8
        %p446 = scmp.lt.s32.totalorder %s445, 15
        %s447 = scalar_select %p446, %s445, 15
        %s448 = smul.u32 16, %s27
        %p449 = scmp.lt.s32.totalorder %s26, 1
        %s450 = scalar_select %p449, %s26, 1
        %p451 = scmp.lt.s32.totalorder %s448, 31
        %s452 = scalar_select %p451, %s448, 31
        %s453 = smul.addr %s450, 32
        %s454 = sadd.s32 %s452, %s453
        %s455 = smul.addr %s454, 4
        %s456 = scalar_lea.vmem %s6, %s455
        %s457 = smul.u32 16, %s27
        %p459 = scmp.gt.s32.totalorder %s27, 0
        %s460 = scalar_select %p459, 1, 0
        %s461 = scvt.s32.f32 %s460
        %p463 = scmp.ne.f32.partialorder %s461, %s461
        %s464 = sshrl.u32 %s461, 16
        %s465 = sand.u32 %s464, 1
        %s466 = sadd.s32 32767, %s465
        %s467 = sadd.s32 %s461, %s466
        %s468 = sand.u32 %s467, 4294901760
        %s469 = scalar_select %p463, 2143289344, %s468
        %s471 = sshrl.u32 %s469, 16
        %p472 = scmp.lt.s32.totalorder %s27, 1
        %s473 = scalar_select %p472, 1, 0
        %s474 = scvt.s32.f32 %s473
        %p476 = scmp.ne.f32.partialorder %s474, %s474
        %s477 = sshrl.u32 %s474, 16
        %s478 = sand.u32 %s477, 1
        %s479 = sadd.s32 32767, %s478
        %s480 = sadd.s32 %s474, %s479
        %s481 = sand.u32 %s480, 4294901760
        %s482 = scalar_select %p476, 2143289344, %s481
        %s484 = sshrl.u32 %s482, 16
        %v485 = vld [vmem:[%s415] sm:$0xf]
        %v486 = vld [vmem:[%s415 + $0x4] sm:$0xf]
        %s487 = sshll.u32 %s471, 16
        %s488 = sor.u32 %s471, %s487
        %v489 = vstv %s488
        %v491 = vmul.bf16 %v485, %v489
        %v492 = vmul.bf16 %v486, %v489
        %vm493 = vsmask.f32 256
        %vm494 = vsmask.f32 4368
        %vm495 = vmor %vm493, %vm494
        %v497 = vshrl.u32 %v491, 16
        %v499 = vrot.slane %v497, 7
        %v500 = vshll.u32 %v491, 16
        %v502 = vor.u32 %v499, %v500
        %v503 = vrot.slane %v499, 4
        %v505 = vshrl.u32 %v492, 16
        %v507 = vrot.slane %v505, 7
        %v508 = vshll.u32 %v492, 16
        %v510 = vor.u32 %v507, %v508
        %v511 = vsel %vm495, %v503, %v510
        %v512 = vrot.slane %v507, 4
        %vm516 = vcmask 27648
        %vm517 = vsmask.f32 7938
        %vm518 = vmand %vm516, %vm517
        %v519 = vld [vmem:[#allocation2] sm:$0xf]
        %v520 = vsel %vm518, %v502, %v519
        %521 = vst [vmem:[#allocation2] sm:$0xf] %v520
        %vm522 = vcmask 27648
        %523 = vst.msk [vmem:[#allocation2 + $0x4] sm:$0xf] %vm522, %v511
        %vm524 = vcmask 24576
        %vm525 = vmand %vm524, %vm493
        %v526 = vld [vmem:[#allocation2 + $0x8] sm:$0x1]
        %v527 = vsel %vm525, %v512, %v526
        %528 = vst [vmem:[#allocation2 + $0x8] sm:$0x1] %v527
        %v529 = vld [vmem:[%s429] sm:$0xf]
        %v530 = vld [vmem:[%s429 + $0x4] sm:$0xf]
        %v531 = vld [vmem:[%s429 + $0x8] sm:$0xf]
        %v532 = vld [vmem:[%s429 + $0xc] sm:$0xf]
        %v533 = vld [vmem:[%s429 + $0x10] sm:$0xf]
        %v534 = vld [vmem:[%s429 + $0x14] sm:$0xf]
        %v535 = vld [vmem:[%s429 + $0x18] sm:$0xf]
        %v536 = vld [vmem:[%s429 + $0x1c] sm:$0xf]
        %v537 = vld [vmem:[%s429 + $0x20] sm:$0xf]
        %v538 = vld [vmem:[%s429 + $0x24] sm:$0xf]
        %v539 = vld [vmem:[%s429 + $0x28] sm:$0xf]
        %v540 = vld [vmem:[%s429 + $0x2c] sm:$0xf]
        %v541 = vld [vmem:[%s429 + $0x30] sm:$0xf]
        %v542 = vld [vmem:[%s429 + $0x34] sm:$0xf]
        %v543 = vld [vmem:[%s429 + $0x38] sm:$0xf]
        %v544 = vld [vmem:[%s429 + $0x3c] sm:$0xf]
        %v546 = vshrl.u32 %v529, 16
        %v548 = vrot.slane %v546, 7
        %v549 = vshll.u32 %v529, 16
        %v551 = vor.u32 %v548, %v549
        %v552 = vrot.slane %v548, 4
        %v554 = vshrl.u32 %v530, 16
        %v556 = vrot.slane %v554, 7
        %v557 = vshll.u32 %v530, 16
        %v559 = vor.u32 %v556, %v557
        %v560 = vsel %vm495, %v552, %v559
        %v561 = vrot.slane %v556, 4
        %v563 = vshrl.u32 %v531, 16
        %v565 = vrot.slane %v563, 7
        %v566 = vshll.u32 %v531, 16
        %v568 = vor.u32 %v565, %v566
        %v569 = vrot.slane %v565, 4
        %v571 = vshrl.u32 %v532, 16
        %v573 = vrot.slane %v571, 7
        %v574 = vshll.u32 %v532, 16
        %v576 = vor.u32 %v573, %v574
        %v577 = vsel %vm495, %v569, %v576
        %v578 = vrot.slane %v573, 4
        %v580 = vshrl.u32 %v533, 16
        %v582 = vrot.slane %v580, 7
        %v583 = vshll.u32 %v533, 16
        %v585 = vor.u32 %v582, %v583
        %v586 = vrot.slane %v582, 4
        %v588 = vshrl.u32 %v534, 16
        %v590 = vrot.slane %v588, 7
        %v591 = vshll.u32 %v534, 16
        %v593 = vor.u32 %v590, %v591
        %v594 = vsel %vm495, %v586, %v593
        %v595 = vrot.slane %v590, 4
        %v597 = vshrl.u32 %v535, 16
        %v599 = vrot.slane %v597, 7
        %v600 = vshll.u32 %v535, 16
        %v602 = vor.u32 %v599, %v600
        %v603 = vrot.slane %v599, 4
        %v605 = vshrl.u32 %v536, 16
        %v607 = vrot.slane %v605, 7
        %v608 = vshll.u32 %v536, 16
        %v610 = vor.u32 %v607, %v608
        %v611 = vsel %vm495, %v603, %v610
        %v612 = vrot.slane %v607, 4
        %v614 = vshrl.u32 %v537, 16
        %v616 = vrot.slane %v614, 7
        %v617 = vshll.u32 %v537, 16
        %v619 = vor.u32 %v616, %v617
        %v620 = vrot.slane %v616, 4
        %v622 = vshrl.u32 %v538, 16
        %v624 = vrot.slane %v622, 7
        %v625 = vshll.u32 %v538, 16
        %v627 = vor.u32 %v624, %v625
        %v628 = vsel %vm495, %v620, %v627
        %v629 = vrot.slane %v624, 4
        %v631 = vshrl.u32 %v539, 16
        %v633 = vrot.slane %v631, 7
        %v634 = vshll.u32 %v539, 16
        %v636 = vor.u32 %v633, %v634
        %v637 = vrot.slane %v633, 4
        %v639 = vshrl.u32 %v540, 16
        %v641 = vrot.slane %v639, 7
        %v642 = vshll.u32 %v540, 16
        %v644 = vor.u32 %v641, %v642
        %v645 = vsel %vm495, %v637, %v644
        %v646 = vrot.slane %v641, 4
        %v648 = vshrl.u32 %v541, 16
        %v650 = vrot.slane %v648, 7
        %v651 = vshll.u32 %v541, 16
        %v653 = vor.u32 %v650, %v651
        %v654 = vrot.slane %v650, 4
        %v656 = vshrl.u32 %v542, 16
        %v658 = vrot.slane %v656, 7
        %v659 = vshll.u32 %v542, 16
        %v661 = vor.u32 %v658, %v659
        %v662 = vsel %vm495, %v654, %v661
        %v663 = vrot.slane %v658, 4
        %v665 = vshrl.u32 %v543, 16
        %v667 = vrot.slane %v665, 7
        %v668 = vshll.u32 %v543, 16
        %v670 = vor.u32 %v667, %v668
        %v671 = vrot.slane %v667, 4
        %v673 = vshrl.u32 %v544, 16
        %v675 = vrot.slane %v673, 7
        %v676 = vshll.u32 %v544, 16
        %v678 = vor.u32 %v675, %v676
        %v679 = vsel %vm495, %v671, %v678
        %v680 = vrot.slane %v675, 4
        %s705 = scalar_lea.vmem [#allocation2], 12
        %v706 = vld [vmem:[%s705] sm:$0xf]
        %v707 = vsel %vm518, %v551, %v706
        %708 = vst [vmem:[%s705] sm:$0xf] %v707
        %709 = vst.msk [vmem:[%s705 + $0x4] sm:$0xf] %vm522, %v560
        %v710 = vld [vmem:[%s705 + $0x8] sm:$0x1]
        %v711 = vsel %vm525, %v561, %v710
        %712 = vst [vmem:[%s705 + $0x8] sm:$0x1] %v711
        %v713 = vld [vmem:[%s705 + $0xc] sm:$0xf]
        %v714 = vsel %vm518, %v568, %v713
        %715 = vst [vmem:[%s705 + $0xc] sm:$0xf] %v714
        %716 = vst.msk [vmem:[%s705 + $0x10] sm:$0xf] %vm522, %v577
        %v717 = vld [vmem:[%s705 + $0x14] sm:$0x1]
        %v718 = vsel %vm525, %v578, %v717
        %719 = vst [vmem:[%s705 + $0x14] sm:$0x1] %v718
        %v720 = vld [vmem:[%s705 + $0x18] sm:$0xf]
        %v721 = vsel %vm518, %v585, %v720
        %722 = vst [vmem:[%s705 + $0x18] sm:$0xf] %v721
        %723 = vst.msk [vmem:[%s705 + $0x1c] sm:$0xf] %vm522, %v594
        %v724 = vld [vmem:[%s705 + $0x20] sm:$0x1]
        %v725 = vsel %vm525, %v595, %v724
        %726 = vst [vmem:[%s705 + $0x20] sm:$0x1] %v725
        %v727 = vld [vmem:[%s705 + $0x24] sm:$0xf]
        %v728 = vsel %vm518, %v602, %v727
        %729 = vst [vmem:[%s705 + $0x24] sm:$0xf] %v728
        %730 = vst.msk [vmem:[%s705 + $0x28] sm:$0xf] %vm522, %v611
        %v731 = vld [vmem:[%s705 + $0x2c] sm:$0x1]
        %v732 = vsel %vm525, %v612, %v731
        %733 = vst [vmem:[%s705 + $0x2c] sm:$0x1] %v732
        %v734 = vld [vmem:[%s705 + $0x30] sm:$0xf]
        %v735 = vsel %vm518, %v619, %v734
        %736 = vst [vmem:[%s705 + $0x30] sm:$0xf] %v735
        %737 = vst.msk [vmem:[%s705 + $0x34] sm:$0xf] %vm522, %v628
        %v738 = vld [vmem:[%s705 + $0x38] sm:$0x1]
        %v739 = vsel %vm525, %v629, %v738
        %740 = vst [vmem:[%s705 + $0x38] sm:$0x1] %v739
        %v741 = vld [vmem:[%s705 + $0x3c] sm:$0xf]
        %v742 = vsel %vm518, %v636, %v741
        %743 = vst [vmem:[%s705 + $0x3c] sm:$0xf] %v742
        %744 = vst.msk [vmem:[%s705 + $0x40] sm:$0xf] %vm522, %v645
        %v745 = vld [vmem:[%s705 + $0x44] sm:$0x1]
        %v746 = vsel %vm525, %v646, %v745
        %747 = vst [vmem:[%s705 + $0x44] sm:$0x1] %v746
        %v748 = vld [vmem:[%s705 + $0x48] sm:$0xf]
        %v749 = vsel %vm518, %v653, %v748
        %750 = vst [vmem:[%s705 + $0x48] sm:$0xf] %v749
        %751 = vst.msk [vmem:[%s705 + $0x4c] sm:$0xf] %vm522, %v662
        %v752 = vld [vmem:[%s705 + $0x50] sm:$0x1]
        %v753 = vsel %vm525, %v663, %v752
        %754 = vst [vmem:[%s705 + $0x50] sm:$0x1] %v753
        %v755 = vld [vmem:[%s705 + $0x54] sm:$0xf]
        %v756 = vsel %vm518, %v670, %v755
        %757 = vst [vmem:[%s705 + $0x54] sm:$0xf] %v756
        %758 = vst.msk [vmem:[%s705 + $0x58] sm:$0xf] %vm522, %v679
        %v759 = vld [vmem:[%s705 + $0x5c] sm:$0x1]
        %v760 = vsel %vm525, %v680, %v759
        %761 = vst [vmem:[%s705 + $0x5c] sm:$0x1] %v760
        %v762 = vld [vmem:[%s443] sm:$0xf]
        %v763 = vld [vmem:[%s443 + $0x4] sm:$0xf]
        %s764 = sshll.u32 %s484, 16
        %s765 = sor.u32 %s484, %s764
        %v766 = vstv %s765
        %v768 = vmul.bf16 %v762, %v766
        %v769 = vmul.bf16 %v763, %v766
        %v771 = vshrl.u32 %v768, 16
        %v773 = vrot.slane %v771, 7
        %v774 = vshll.u32 %v768, 16
        %v776 = vor.u32 %v773, %v774
        %v777 = vrot.slane %v773, 4
        %v779 = vshrl.u32 %v769, 16
        %v781 = vrot.slane %v779, 7
        %v782 = vshll.u32 %v769, 16
        %v784 = vor.u32 %v781, %v782
        %v785 = vsel %vm495, %v777, %v784
        %v786 = vrot.slane %v781, 4
        %s790 = scalar_lea.vmem [#allocation2], 108
        %v791 = vld [vmem:[%s790] sm:$0xf]
        %v792 = vsel %vm518, %v776, %v791
        %793 = vst [vmem:[%s790] sm:$0xf] %v792
        %794 = vst.msk [vmem:[%s790 + $0x4] sm:$0xf] %vm522, %v785
        %v795 = vld [vmem:[%s790 + $0x8] sm:$0x1]
        %v796 = vsel %vm525, %v786, %v795
        %797 = vst [vmem:[%s790 + $0x8] sm:$0x1] %v796
        %v798 = vld [vmem:[#allocation2] sm:$0x1]
        %v799 = vsel %vm525, 0, %v798
        %800 = vst [vmem:[#allocation2] sm:$0x1] %v799
        %v801 = vld [vmem:[#allocation2 + $0xc] sm:$0x1]
        %v802 = vsel %vm525, 0, %v801
        %803 = vst [vmem:[#allocation2 + $0xc] sm:$0x1] %v802
        %v804 = vld [vmem:[#allocation2 + $0x18] sm:$0x1]
        %v805 = vsel %vm525, 0, %v804
        %806 = vst [vmem:[#allocation2 + $0x18] sm:$0x1] %v805
        %v807 = vld [vmem:[#allocation2 + $0x24] sm:$0x1]
        %v808 = vsel %vm525, 0, %v807
        %809 = vst [vmem:[#allocation2 + $0x24] sm:$0x1] %v808
        %v810 = vld [vmem:[#allocation2 + $0x30] sm:$0x1]
        %v811 = vsel %vm525, 0, %v810
        %812 = vst [vmem:[#allocation2 + $0x30] sm:$0x1] %v811
        %v813 = vld [vmem:[#allocation2 + $0x3c] sm:$0x1]
        %v814 = vsel %vm525, 0, %v813
        %815 = vst [vmem:[#allocation2 + $0x3c] sm:$0x1] %v814
        %v816 = vld [vmem:[#allocation2 + $0x48] sm:$0x1]
        %v817 = vsel %vm525, 0, %v816
        %818 = vst [vmem:[#allocation2 + $0x48] sm:$0x1] %v817
        %v819 = vld [vmem:[#allocation2 + $0x54] sm:$0x1]
        %v820 = vsel %vm525, 0, %v819
        %821 = vst [vmem:[#allocation2 + $0x54] sm:$0x1] %v820
        %v822 = vld [vmem:[#allocation2 + $0x60] sm:$0x1]
        %v823 = vsel %vm525, 0, %v822
        %824 = vst [vmem:[#allocation2 + $0x60] sm:$0x1] %v823
        %v825 = vld [vmem:[#allocation2 + $0x6c] sm:$0x1]
        %v826 = vsel %vm525, 0, %v825
        %827 = vst [vmem:[#allocation2 + $0x6c] sm:$0x1] %v826
        %vm828 = vmand %vm524, %vm517
        %v829 = vld [vmem:[#allocation2 + $0x8] sm:$0x1]
        %v830 = vsel %vm828, 0, %v829
        %831 = vst [vmem:[#allocation2 + $0x8] sm:$0x1] %v830
        %v832 = vld [vmem:[#allocation2 + $0x14] sm:$0x1]
        %v833 = vsel %vm828, 0, %v832
        %834 = vst [vmem:[#allocation2 + $0x14] sm:$0x1] %v833
        %v835 = vld [vmem:[#allocation2 + $0x20] sm:$0x1]
        %v836 = vsel %vm828, 0, %v835
        %837 = vst [vmem:[#allocation2 + $0x20] sm:$0x1] %v836
        %v838 = vld [vmem:[#allocation2 + $0x2c] sm:$0x1]
        %v839 = vsel %vm828, 0, %v838
        %840 = vst [vmem:[#allocation2 + $0x2c] sm:$0x1] %v839
        %v841 = vld [vmem:[#allocation2 + $0x38] sm:$0x1]
        %v842 = vsel %vm828, 0, %v841
        %843 = vst [vmem:[#allocation2 + $0x38] sm:$0x1] %v842
        %v844 = vld [vmem:[#allocation2 + $0x44] sm:$0x1]
        %v845 = vsel %vm828, 0, %v844
        %846 = vst [vmem:[#allocation2 + $0x44] sm:$0x1] %v845
        %v847 = vld [vmem:[#allocation2 + $0x50] sm:$0x1]
        %v848 = vsel %vm828, 0, %v847
        %849 = vst [vmem:[#allocation2 + $0x50] sm:$0x1] %v848
        %v850 = vld [vmem:[#allocation2 + $0x5c] sm:$0x1]
        %v851 = vsel %vm828, 0, %v850
        %852 = vst [vmem:[#allocation2 + $0x5c] sm:$0x1] %v851
        %v853 = vld [vmem:[#allocation2 + $0x68] sm:$0x1]
        %v854 = vsel %vm828, 0, %v853
        %855 = vst [vmem:[#allocation2 + $0x68] sm:$0x1] %v854
        %v856 = vld [vmem:[#allocation2 + $0x74] sm:$0x1]
        %v857 = vsel %vm828, 0, %v856
        %858 = vst [vmem:[#allocation2 + $0x74] sm:$0x1] %v857
        %v859 = vld [vmem:[#allocation2] sm:$0xf]
        %v860 = vld [vmem:[#allocation2 + $0x4] sm:$0xf]
        %v861 = vld [vmem:[#allocation2 + $0xc] sm:$0xf]
        %v862 = vld [vmem:[#allocation2 + $0x10] sm:$0xf]
        %v863 = vld [vmem:[#allocation2 + $0x18] sm:$0xf]
        %v864 = vld [vmem:[#allocation2 + $0x1c] sm:$0xf]
        %v865 = vld [vmem:[#allocation2 + $0x24] sm:$0xf]
        %v866 = vld [vmem:[#allocation2 + $0x28] sm:$0xf]
        %v867 = vld [vmem:[#allocation2 + $0x30] sm:$0xf]
        %v868 = vld [vmem:[#allocation2 + $0x34] sm:$0xf]
        %v869 = vld [vmem:[#allocation2 + $0x3c] sm:$0xf]
        %v870 = vld [vmem:[#allocation2 + $0x40] sm:$0xf]
        %v871 = vld [vmem:[#allocation2 + $0x48] sm:$0xf]
        %v872 = vld [vmem:[#allocation2 + $0x4c] sm:$0xf]
        %v873 = vld [vmem:[#allocation2 + $0x54] sm:$0xf]
        %v874 = vld [vmem:[#allocation2 + $0x58] sm:$0xf]
        %v875 = vld [vmem:[#allocation2 + $0x8] sm:$0x1]
        %v876 = vld [vmem:[#allocation2 + $0x14] sm:$0x1]
        %v877 = vld [vmem:[#allocation2 + $0x20] sm:$0x1]
        %v878 = vld [vmem:[#allocation2 + $0x2c] sm:$0x1]
        %v879 = vld [vmem:[#allocation2 + $0x38] sm:$0x1]
        %v880 = vld [vmem:[#allocation2 + $0x44] sm:$0x1]
        %v881 = vld [vmem:[#allocation2 + $0x50] sm:$0x1]
        %v882 = vld [vmem:[#allocation2 + $0x5c] sm:$0x1]
        %v883 = vld [vmem:[#allocation2] sm:$0xe]
        %v884 = vld [vmem:[#allocation2 + $0xc] sm:$0xe]
        %v885 = vld [vmem:[#allocation2 + $0x18] sm:$0xe]
        %v886 = vld [vmem:[#allocation2 + $0x24] sm:$0xe]
        %v887 = vld [vmem:[#allocation2 + $0x30] sm:$0xe]
        %v888 = vld [vmem:[#allocation2 + $0x3c] sm:$0xe]
        %v889 = vld [vmem:[#allocation2 + $0x48] sm:$0xe]
        %v890 = vld [vmem:[#allocation2 + $0x54] sm:$0xe]
        %v891 = vld [vmem:[%s705] sm:$0xf]
        %v892 = vld [vmem:[%s705 + $0x4] sm:$0xf]
        %v893 = vld [vmem:[%s705 + $0xc] sm:$0xf]
        %v894 = vld [vmem:[%s705 + $0x10] sm:$0xf]
        %v895 = vld [vmem:[%s705 + $0x18] sm:$0xf]
        %v896 = vld [vmem:[%s705 + $0x1c] sm:$0xf]
        %v897 = vld [vmem:[%s705 + $0x24] sm:$0xf]
        %v898 = vld [vmem:[%s705 + $0x28] sm:$0xf]
        %v899 = vld [vmem:[%s705 + $0x30] sm:$0xf]
        %v900 = vld [vmem:[%s705 + $0x34] sm:$0xf]
        %v901 = vld [vmem:[%s705 + $0x3c] sm:$0xf]
        %v902 = vld [vmem:[%s705 + $0x40] sm:$0xf]
        %v903 = vld [vmem:[%s705 + $0x48] sm:$0xf]
        %v904 = vld [vmem:[%s705 + $0x4c] sm:$0xf]
        %v905 = vld [vmem:[%s705 + $0x54] sm:$0xf]
        %v906 = vld [vmem:[%s705 + $0x58] sm:$0xf]
        %v907 = vld [vmem:[%s705 + $0x8] sm:$0x1]
        %v908 = vld [vmem:[%s705 + $0x14] sm:$0x1]
        %v909 = vld [vmem:[%s705 + $0x20] sm:$0x1]
        %v910 = vld [vmem:[%s705 + $0x2c] sm:$0x1]
        %v911 = vld [vmem:[%s705 + $0x38] sm:$0x1]
        %v912 = vld [vmem:[%s705 + $0x44] sm:$0x1]
        %v913 = vld [vmem:[%s705 + $0x50] sm:$0x1]
        %v914 = vld [vmem:[%s705 + $0x5c] sm:$0x1]
        %v915 = vld [vmem:[%s705] sm:$0xe]
        %v916 = vld [vmem:[%s705 + $0xc] sm:$0xe]
        %v917 = vld [vmem:[%s705 + $0x18] sm:$0xe]
        %v918 = vld [vmem:[%s705 + $0x24] sm:$0xe]
        %v919 = vld [vmem:[%s705 + $0x30] sm:$0xe]
        %v920 = vld [vmem:[%s705 + $0x3c] sm:$0xe]
        %v921 = vld [vmem:[%s705 + $0x48] sm:$0xe]
        %v922 = vld [vmem:[%s705 + $0x54] sm:$0xe]
        %s923 = scalar_lea.vmem [#allocation2], 24
        %v924 = vld [vmem:[%s923] sm:$0xf]
        %v925 = vld [vmem:[%s923 + $0x4] sm:$0xf]
        %v926 = vld [vmem:[%s923 + $0xc] sm:$0xf]
        %v927 = vld [vmem:[%s923 + $0x10] sm:$0xf]
        %v928 = vld [vmem:[%s923 + $0x18] sm:$0xf]
        %v929 = vld [vmem:[%s923 + $0x1c] sm:$0xf]
        %v930 = vld [vmem:[%s923 + $0x24] sm:$0xf]
        %v931 = vld [vmem:[%s923 + $0x28] sm:$0xf]
        %v932 = vld [vmem:[%s923 + $0x30] sm:$0xf]
        %v933 = vld [vmem:[%s923 + $0x34] sm:$0xf]
        %v934 = vld [vmem:[%s923 + $0x3c] sm:$0xf]
        %v935 = vld [vmem:[%s923 + $0x40] sm:$0xf]
        %v936 = vld [vmem:[%s923 + $0x48] sm:$0xf]
        %v937 = vld [vmem:[%s923 + $0x4c] sm:$0xf]
        %v938 = vld [vmem:[%s923 + $0x54] sm:$0xf]
        %v939 = vld [vmem:[%s923 + $0x58] sm:$0xf]
        %v940 = vld [vmem:[%s923 + $0x8] sm:$0x1]
        %v941 = vld [vmem:[%s923 + $0x14] sm:$0x1]
        %v942 = vld [vmem:[%s923 + $0x20] sm:$0x1]
        %v943 = vld [vmem:[%s923 + $0x2c] sm:$0x1]
        %v944 = vld [vmem:[%s923 + $0x38] sm:$0x1]
        %v945 = vld [vmem:[%s923 + $0x44] sm:$0x1]
        %v946 = vld [vmem:[%s923 + $0x50] sm:$0x1]
        %v947 = vld [vmem:[%s923 + $0x5c] sm:$0x1]
        %v948 = vld [vmem:[%s923] sm:$0xe]
        %v949 = vld [vmem:[%s923 + $0xc] sm:$0xe]
        %v950 = vld [vmem:[%s923 + $0x18] sm:$0xe]
        %v951 = vld [vmem:[%s923 + $0x24] sm:$0xe]
        %v952 = vld [vmem:[%s923 + $0x30] sm:$0xe]
        %v953 = vld [vmem:[%s923 + $0x3c] sm:$0xe]
        %v954 = vld [vmem:[%s923 + $0x48] sm:$0xe]
        %v955 = vld [vmem:[%s923 + $0x54] sm:$0xe]
        %v972 = vunpack.c.l.b16 %v859
        %v973 = vunpack.c.l.b16 %v860
        %v974 = vunpack.c.l.b16 %v861
        %v975 = vunpack.c.l.b16 %v862
        %v976 = vunpack.c.l.b16 %v863
        %v977 = vunpack.c.l.b16 %v864
        %v978 = vunpack.c.l.b16 %v865
        %v979 = vunpack.c.l.b16 %v866
        %v980 = vunpack.c.l.b16 %v867
        %v981 = vunpack.c.l.b16 %v868
        %v982 = vunpack.c.l.b16 %v869
        %v983 = vunpack.c.l.b16 %v870
        %v984 = vunpack.c.l.b16 %v871
        %v985 = vunpack.c.l.b16 %v872
        %v986 = vunpack.c.l.b16 %v873
        %v987 = vunpack.c.l.b16 %v874
        %v988 = vpack.c.b16 %v973, %v972
        %v989 = vpack.c.b16 %v975, %v974
        %v990 = vpack.c.b16 %v977, %v976
        %v991 = vpack.c.b16 %v979, %v978
        %v992 = vpack.c.b16 %v981, %v980
        %v993 = vpack.c.b16 %v983, %v982
        %v994 = vpack.c.b16 %v985, %v984
        %v995 = vpack.c.b16 %v987, %v986
        %v1004 = vunpack.c.l.b16 %v875
        %v1005 = vunpack.c.l.b16 %v876
        %v1006 = vunpack.c.l.b16 %v877
        %v1007 = vunpack.c.l.b16 %v878
        %v1008 = vunpack.c.l.b16 %v879
        %v1009 = vunpack.c.l.b16 %v880
        %v1010 = vunpack.c.l.b16 %v881
        %v1011 = vunpack.c.l.b16 %v882
        %v1012 = vpack.c.b16 %v1004, %v1004
        %v1013 = vpack.c.b16 %v1005, %v1005
        %v1014 = vpack.c.b16 %v1006, %v1006
        %v1015 = vpack.c.b16 %v1007, %v1007
        %v1016 = vpack.c.b16 %v1008, %v1008
        %v1017 = vpack.c.b16 %v1009, %v1009
        %v1018 = vpack.c.b16 %v1010, %v1010
        %v1019 = vpack.c.b16 %v1011, %v1011
        %vm1020 = vsmask.f32 7424
        %v1022 = vshrl.u32 %v988, 16
        %v1024 = vshll.u32 %v988, 16
        %v1026 = vrot.slane %v1024, 1
        %v1027 = vor.u32 %v1022, %v1026
        %v1029 = vshll.u32 %v1012, 16
        %v1031 = vrot.slane %v1029, 1
        %v1032 = vsel %vm1020, %v1027, %v1031
        %v1034 = vshrl.u32 %v989, 16
        %v1036 = vshll.u32 %v989, 16
        %v1038 = vrot.slane %v1036, 1
        %v1039 = vor.u32 %v1034, %v1038
        %v1041 = vshll.u32 %v1013, 16
        %v1043 = vrot.slane %v1041, 1
        %v1044 = vsel %vm1020, %v1039, %v1043
        %v1046 = vshrl.u32 %v990, 16
        %v1048 = vshll.u32 %v990, 16
        %v1050 = vrot.slane %v1048, 1
        %v1051 = vor.u32 %v1046, %v1050
        %v1053 = vshll.u32 %v1014, 16
        %v1055 = vrot.slane %v1053, 1
        %v1056 = vsel %vm1020, %v1051, %v1055
        %v1058 = vshrl.u32 %v991, 16
        %v1060 = vshll.u32 %v991, 16
        %v1062 = vrot.slane %v1060, 1
        %v1063 = vor.u32 %v1058, %v1062
        %v1065 = vshll.u32 %v1015, 16
        %v1067 = vrot.slane %v1065, 1
        %v1068 = vsel %vm1020, %v1063, %v1067
        %v1070 = vshrl.u32 %v992, 16
        %v1072 = vshll.u32 %v992, 16
        %v1074 = vrot.slane %v1072, 1
        %v1075 = vor.u32 %v1070, %v1074
        %v1077 = vshll.u32 %v1016, 16
        %v1079 = vrot.slane %v1077, 1
        %v1080 = vsel %vm1020, %v1075, %v1079
        %v1082 = vshrl.u32 %v993, 16
        %v1084 = vshll.u32 %v993, 16
        %v1086 = vrot.slane %v1084, 1
        %v1087 = vor.u32 %v1082, %v1086
        %v1089 = vshll.u32 %v1017, 16
        %v1091 = vrot.slane %v1089, 1
        %v1092 = vsel %vm1020, %v1087, %v1091
        %v1094 = vshrl.u32 %v994, 16
        %v1096 = vshll.u32 %v994, 16
        %v1098 = vrot.slane %v1096, 1
        %v1099 = vor.u32 %v1094, %v1098
        %v1101 = vshll.u32 %v1018, 16
        %v1103 = vrot.slane %v1101, 1
        %v1104 = vsel %vm1020, %v1099, %v1103
        %v1106 = vshrl.u32 %v995, 16
        %v1108 = vshll.u32 %v995, 16
        %v1110 = vrot.slane %v1108, 1
        %v1111 = vor.u32 %v1106, %v1110
        %v1113 = vshll.u32 %v1019, 16
        %v1115 = vrot.slane %v1113, 1
        %v1116 = vsel %vm1020, %v1111, %v1115
        %1117 = vrot.lane.b32.xlu0 %v1032, 4
        %v1118 = vpop.permute.xlu0 %1117
        %1119 = vrot.lane.b32.xlu0 %v1044, 4
        %v1120 = vpop.permute.xlu0 %1119
        %1121 = vrot.lane.b32.xlu0 %v1056, 4
        %v1122 = vpop.permute.xlu0 %1121
        %1123 = vrot.lane.b32.xlu0 %v1068, 4
        %v1124 = vpop.permute.xlu0 %1123
        %1125 = vrot.lane.b32.xlu0 %v1080, 4
        %v1126 = vpop.permute.xlu0 %1125
        %1127 = vrot.lane.b32.xlu0 %v1092, 4
        %v1128 = vpop.permute.xlu0 %1127
        %1129 = vrot.lane.b32.xlu0 %v1104, 4
        %v1130 = vpop.permute.xlu0 %1129
        %1131 = vrot.lane.b32.xlu0 %v1116, 4
        %v1132 = vpop.permute.xlu0 %1131
        %v1141 = vunpack.c.l.b16 %v883
        %v1142 = vunpack.c.l.b16 %v884
        %v1143 = vunpack.c.l.b16 %v885
        %v1144 = vunpack.c.l.b16 %v886
        %v1145 = vunpack.c.l.b16 %v887
        %v1146 = vunpack.c.l.b16 %v888
        %v1147 = vunpack.c.l.b16 %v889
        %v1148 = vunpack.c.l.b16 %v890
        %v1149 = vpack.c.b16 %v973, %v1141
        %v1150 = vpack.c.b16 %v975, %v1142
        %v1151 = vpack.c.b16 %v977, %v1143
        %v1152 = vpack.c.b16 %v979, %v1144
        %v1153 = vpack.c.b16 %v981, %v1145
        %v1154 = vpack.c.b16 %v983, %v1146
        %v1155 = vpack.c.b16 %v985, %v1147
        %v1156 = vpack.c.b16 %v987, %v1148
        %vm1157 = vcmask 1046528
        %v1158 = vrot.slane %v1149, 1
        %v1159 = vrot.slane %v1012, 1
        %v1160 = vsel %vm1157, %v1158, %v1159
        %v1161 = vrot.slane %v1150, 1
        %v1162 = vrot.slane %v1013, 1
        %v1163 = vsel %vm1157, %v1161, %v1162
        %v1164 = vrot.slane %v1151, 1
        %v1165 = vrot.slane %v1014, 1
        %v1166 = vsel %vm1157, %v1164, %v1165
        %v1167 = vrot.slane %v1152, 1
        %v1168 = vrot.slane %v1015, 1
        %v1169 = vsel %vm1157, %v1167, %v1168
        %v1170 = vrot.slane %v1153, 1
        %v1171 = vrot.slane %v1016, 1
        %v1172 = vsel %vm1157, %v1170, %v1171
        %v1173 = vrot.slane %v1154, 1
        %v1174 = vrot.slane %v1017, 1
        %v1175 = vsel %vm1157, %v1173, %v1174
        %v1176 = vrot.slane %v1155, 1
        %v1177 = vrot.slane %v1018, 1
        %v1178 = vsel %vm1157, %v1176, %v1177
        %v1179 = vrot.slane %v1156, 1
        %v1180 = vrot.slane %v1019, 1
        %v1181 = vsel %vm1157, %v1179, %v1180
        %1182 = vrot.lane.b32.xlu0 %v1160, 8
        %v1183 = vpop.permute.xlu0 %1182
        %1184 = vrot.lane.b32.xlu0 %v1163, 8
        %v1185 = vpop.permute.xlu0 %1184
        %1186 = vrot.lane.b32.xlu0 %v1166, 8
        %v1187 = vpop.permute.xlu0 %1186
        %1188 = vrot.lane.b32.xlu0 %v1169, 8
        %v1189 = vpop.permute.xlu0 %1188
        %1190 = vrot.lane.b32.xlu0 %v1172, 8
        %v1191 = vpop.permute.xlu0 %1190
        %1192 = vrot.lane.b32.xlu0 %v1175, 8
        %v1193 = vpop.permute.xlu0 %1192
        %1194 = vrot.lane.b32.xlu0 %v1178, 8
        %v1195 = vpop.permute.xlu0 %1194
        %1196 = vrot.lane.b32.xlu0 %v1181, 8
        %v1197 = vpop.permute.xlu0 %1196
        %v1214 = vunpack.c.l.b16 %v891
        %v1215 = vunpack.c.l.b16 %v892
        %v1216 = vunpack.c.l.b16 %v893
        %v1217 = vunpack.c.l.b16 %v894
        %v1218 = vunpack.c.l.b16 %v895
        %v1219 = vunpack.c.l.b16 %v896
        %v1220 = vunpack.c.l.b16 %v897
        %v1221 = vunpack.c.l.b16 %v898
        %v1222 = vunpack.c.l.b16 %v899
        %v1223 = vunpack.c.l.b16 %v900
        %v1224 = vunpack.c.l.b16 %v901
        %v1225 = vunpack.c.l.b16 %v902
        %v1226 = vunpack.c.l.b16 %v903
        %v1227 = vunpack.c.l.b16 %v904
        %v1228 = vunpack.c.l.b16 %v905
        %v1229 = vunpack.c.l.b16 %v906
        %v1230 = vpack.c.b16 %v1215, %v1214
        %v1231 = vpack.c.b16 %v1217, %v1216
        %v1232 = vpack.c.b16 %v1219, %v1218
        %v1233 = vpack.c.b16 %v1221, %v1220
        %v1234 = vpack.c.b16 %v1223, %v1222
        %v1235 = vpack.c.b16 %v1225, %v1224
        %v1236 = vpack.c.b16 %v1227, %v1226
        %v1237 = vpack.c.b16 %v1229, %v1228
        %1238 = vrot.lane.b32.xlu0 %v1230, 12
        %v1239 = vpop.permute.xlu0 %1238
        %1240 = vrot.lane.b32.xlu0 %v1231, 12
        %v1241 = vpop.permute.xlu0 %1240
        %1242 = vrot.lane.b32.xlu0 %v1232, 12
        %v1243 = vpop.permute.xlu0 %1242
        %1244 = vrot.lane.b32.xlu0 %v1233, 12
        %v1245 = vpop.permute.xlu0 %1244
        %1246 = vrot.lane.b32.xlu0 %v1234, 12
        %v1247 = vpop.permute.xlu0 %1246
        %1248 = vrot.lane.b32.xlu0 %v1235, 12
        %v1249 = vpop.permute.xlu0 %1248
        %1250 = vrot.lane.b32.xlu0 %v1236, 12
        %v1251 = vpop.permute.xlu0 %1250
        %1252 = vrot.lane.b32.xlu0 %v1237, 12
        %v1253 = vpop.permute.xlu0 %1252
        %v1262 = vunpack.c.l.b16 %v907
        %v1263 = vunpack.c.l.b16 %v908
        %v1264 = vunpack.c.l.b16 %v909
        %v1265 = vunpack.c.l.b16 %v910
        %v1266 = vunpack.c.l.b16 %v911
        %v1267 = vunpack.c.l.b16 %v912
        %v1268 = vunpack.c.l.b16 %v913
        %v1269 = vunpack.c.l.b16 %v914
        %v1270 = vpack.c.b16 %v1262, %v1262
        %v1271 = vpack.c.b16 %v1263, %v1263
        %v1272 = vpack.c.b16 %v1264, %v1264
        %v1273 = vpack.c.b16 %v1265, %v1265
        %v1274 = vpack.c.b16 %v1266, %v1266
        %v1275 = vpack.c.b16 %v1267, %v1267
        %v1276 = vpack.c.b16 %v1268, %v1268
        %v1277 = vpack.c.b16 %v1269, %v1269
        %v1279 = vshrl.u32 %v1230, 16
        %v1281 = vshll.u32 %v1230, 16
        %v1283 = vrot.slane %v1281, 1
        %v1284 = vor.u32 %v1279, %v1283
        %v1286 = vshll.u32 %v1270, 16
        %v1288 = vrot.slane %v1286, 1
        %v1289 = vsel %vm1020, %v1284, %v1288
        %v1291 = vshrl.u32 %v1231, 16
        %v1293 = vshll.u32 %v1231, 16
        %v1295 = vrot.slane %v1293, 1
        %v1296 = vor.u32 %v1291, %v1295
        %v1298 = vshll.u32 %v1271, 16
        %v1300 = vrot.slane %v1298, 1
        %v1301 = vsel %vm1020, %v1296, %v1300
        %v1303 = vshrl.u32 %v1232, 16
        %v1305 = vshll.u32 %v1232, 16
        %v1307 = vrot.slane %v1305, 1
        %v1308 = vor.u32 %v1303, %v1307
        %v1310 = vshll.u32 %v1272, 16
        %v1312 = vrot.slane %v1310, 1
        %v1313 = vsel %vm1020, %v1308, %v1312
        %v1315 = vshrl.u32 %v1233, 16
        %v1317 = vshll.u32 %v1233, 16
        %v1319 = vrot.slane %v1317, 1
        %v1320 = vor.u32 %v1315, %v1319
        %v1322 = vshll.u32 %v1273, 16
        %v1324 = vrot.slane %v1322, 1
        %v1325 = vsel %vm1020, %v1320, %v1324
        %v1327 = vshrl.u32 %v1234, 16
        %v1329 = vshll.u32 %v1234, 16
        %v1331 = vrot.slane %v1329, 1
        %v1332 = vor.u32 %v1327, %v1331
        %v1334 = vshll.u32 %v1274, 16
        %v1336 = vrot.slane %v1334, 1
        %v1337 = vsel %vm1020, %v1332, %v1336
        %v1339 = vshrl.u32 %v1235, 16
        %v1341 = vshll.u32 %v1235, 16
        %v1343 = vrot.slane %v1341, 1
        %v1344 = vor.u32 %v1339, %v1343
        %v1346 = vshll.u32 %v1275, 16
        %v1348 = vrot.slane %v1346, 1
        %v1349 = vsel %vm1020, %v1344, %v1348
        %v1351 = vshrl.u32 %v1236, 16
        %v1353 = vshll.u32 %v1236, 16
        %v1355 = vrot.slane %v1353, 1
        %v1356 = vor.u32 %v1351, %v1355
        %v1358 = vshll.u32 %v1276, 16
        %v1360 = vrot.slane %v1358, 1
        %v1361 = vsel %vm1020, %v1356, %v1360
        %v1363 = vshrl.u32 %v1237, 16
        %v1365 = vshll.u32 %v1237, 16
        %v1367 = vrot.slane %v1365, 1
        %v1368 = vor.u32 %v1363, %v1367
        %v1370 = vshll.u32 %v1277, 16
        %v1372 = vrot.slane %v1370, 1
        %v1373 = vsel %vm1020, %v1368, %v1372
        %1374 = vrot.lane.b32.xlu0 %v1289, 16
        %v1375 = vpop.permute.xlu0 %1374
        %1376 = vrot.lane.b32.xlu0 %v1301, 16
        %v1377 = vpop.permute.xlu0 %1376
        %1378 = vrot.lane.b32.xlu0 %v1313, 16
        %v1379 = vpop.permute.xlu0 %1378
        %1380 = vrot.lane.b32.xlu0 %v1325, 16
        %v1381 = vpop.permute.xlu0 %1380
        %1382 = vrot.lane.b32.xlu0 %v1337, 16
        %v1383 = vpop.permute.xlu0 %1382
        %1384 = vrot.lane.b32.xlu0 %v1349, 16
        %v1385 = vpop.permute.xlu0 %1384
        %1386 = vrot.lane.b32.xlu0 %v1361, 16
        %v1387 = vpop.permute.xlu0 %1386
        %1388 = vrot.lane.b32.xlu0 %v1373, 16
        %v1389 = vpop.permute.xlu0 %1388
        %v1398 = vunpack.c.l.b16 %v915
        %v1399 = vunpack.c.l.b16 %v916
        %v1400 = vunpack.c.l.b16 %v917
        %v1401 = vunpack.c.l.b16 %v918
        %v1402 = vunpack.c.l.b16 %v919
        %v1403 = vunpack.c.l.b16 %v920
        %v1404 = vunpack.c.l.b16 %v921
        %v1405 = vunpack.c.l.b16 %v922
        %v1406 = vpack.c.b16 %v1215, %v1398
        %v1407 = vpack.c.b16 %v1217, %v1399
        %v1408 = vpack.c.b16 %v1219, %v1400
        %v1409 = vpack.c.b16 %v1221, %v1401
        %v1410 = vpack.c.b16 %v1223, %v1402
        %v1411 = vpack.c.b16 %v1225, %v1403
        %v1412 = vpack.c.b16 %v1227, %v1404
        %v1413 = vpack.c.b16 %v1229, %v1405
        %v1414 = vrot.slane %v1406, 1
        %v1415 = vrot.slane %v1270, 1
        %v1416 = vsel %vm1157, %v1414, %v1415
        %v1417 = vrot.slane %v1407, 1
        %v1418 = vrot.slane %v1271, 1
        %v1419 = vsel %vm1157, %v1417, %v1418
        %v1420 = vrot.slane %v1408, 1
        %v1421 = vrot.slane %v1272, 1
        %v1422 = vsel %vm1157, %v1420, %v1421
        %v1423 = vrot.slane %v1409, 1
        %v1424 = vrot.slane %v1273, 1
        %v1425 = vsel %vm1157, %v1423, %v1424
        %v1426 = vrot.slane %v1410, 1
        %v1427 = vrot.slane %v1274, 1
        %v1428 = vsel %vm1157, %v1426, %v1427
        %v1429 = vrot.slane %v1411, 1
        %v1430 = vrot.slane %v1275, 1
        %v1431 = vsel %vm1157, %v1429, %v1430
        %v1432 = vrot.slane %v1412, 1
        %v1433 = vrot.slane %v1276, 1
        %v1434 = vsel %vm1157, %v1432, %v1433
        %v1435 = vrot.slane %v1413, 1
        %v1436 = vrot.slane %v1277, 1
        %v1437 = vsel %vm1157, %v1435, %v1436
        %1438 = vrot.lane.b32.xlu0 %v1416, 20
        %v1439 = vpop.permute.xlu0 %1438
        %1440 = vrot.lane.b32.xlu0 %v1419, 20
        %v1441 = vpop.permute.xlu0 %1440
        %1442 = vrot.lane.b32.xlu0 %v1422, 20
        %v1443 = vpop.permute.xlu0 %1442
        %1444 = vrot.lane.b32.xlu0 %v1425, 20
        %v1445 = vpop.permute.xlu0 %1444
        %1446 = vrot.lane.b32.xlu0 %v1428, 20
        %v1447 = vpop.permute.xlu0 %1446
        %1448 = vrot.lane.b32.xlu0 %v1431, 20
        %v1449 = vpop.permute.xlu0 %1448
        %1450 = vrot.lane.b32.xlu0 %v1434, 20
        %v1451 = vpop.permute.xlu0 %1450
        %1452 = vrot.lane.b32.xlu0 %v1437, 20
        %v1453 = vpop.permute.xlu0 %1452
        %v1470 = vunpack.c.l.b16 %v924
        %v1471 = vunpack.c.l.b16 %v925
        %v1472 = vunpack.c.l.b16 %v926
        %v1473 = vunpack.c.l.b16 %v927
        %v1474 = vunpack.c.l.b16 %v928
        %v1475 = vunpack.c.l.b16 %v929
        %v1476 = vunpack.c.l.b16 %v930
        %v1477 = vunpack.c.l.b16 %v931
        %v1478 = vunpack.c.l.b16 %v932
        %v1479 = vunpack.c.l.b16 %v933
        %v1480 = vunpack.c.l.b16 %v934
        %v1481 = vunpack.c.l.b16 %v935
        %v1482 = vunpack.c.l.b16 %v936
        %v1483 = vunpack.c.l.b16 %v937
        %v1484 = vunpack.c.l.b16 %v938
        %v1485 = vunpack.c.l.b16 %v939
        %v1486 = vpack.c.b16 %v1471, %v1470
        %v1487 = vpack.c.b16 %v1473, %v1472
        %v1488 = vpack.c.b16 %v1475, %v1474
        %v1489 = vpack.c.b16 %v1477, %v1476
        %v1490 = vpack.c.b16 %v1479, %v1478
        %v1491 = vpack.c.b16 %v1481, %v1480
        %v1492 = vpack.c.b16 %v1483, %v1482
        %v1493 = vpack.c.b16 %v1485, %v1484
        %1494 = vrot.lane.b32.xlu0 %v1486, 24
        %v1495 = vpop.permute.xlu0 %1494
        %1496 = vrot.lane.b32.xlu0 %v1487, 24
        %v1497 = vpop.permute.xlu0 %1496
        %1498 = vrot.lane.b32.xlu0 %v1488, 24
        %v1499 = vpop.permute.xlu0 %1498
        %1500 = vrot.lane.b32.xlu0 %v1489, 24
        %v1501 = vpop.permute.xlu0 %1500
        %1502 = vrot.lane.b32.xlu0 %v1490, 24
        %v1503 = vpop.permute.xlu0 %1502
        %1504 = vrot.lane.b32.xlu0 %v1491, 24
        %v1505 = vpop.permute.xlu0 %1504
        %1506 = vrot.lane.b32.xlu0 %v1492, 24
        %v1507 = vpop.permute.xlu0 %1506
        %1508 = vrot.lane.b32.xlu0 %v1493, 24
        %v1509 = vpop.permute.xlu0 %1508
        %v1518 = vunpack.c.l.b16 %v940
        %v1519 = vunpack.c.l.b16 %v941
        %v1520 = vunpack.c.l.b16 %v942
        %v1521 = vunpack.c.l.b16 %v943
        %v1522 = vunpack.c.l.b16 %v944
        %v1523 = vunpack.c.l.b16 %v945
        %v1524 = vunpack.c.l.b16 %v946
        %v1525 = vunpack.c.l.b16 %v947
        %v1526 = vpack.c.b16 %v1518, %v1518
        %v1527 = vpack.c.b16 %v1519, %v1519
        %v1528 = vpack.c.b16 %v1520, %v1520
        %v1529 = vpack.c.b16 %v1521, %v1521
        %v1530 = vpack.c.b16 %v1522, %v1522
        %v1531 = vpack.c.b16 %v1523, %v1523
        %v1532 = vpack.c.b16 %v1524, %v1524
        %v1533 = vpack.c.b16 %v1525, %v1525
        %v1535 = vshrl.u32 %v1486, 16
        %v1537 = vshll.u32 %v1486, 16
        %v1539 = vrot.slane %v1537, 1
        %v1540 = vor.u32 %v1535, %v1539
        %v1542 = vshll.u32 %v1526, 16
        %v1544 = vrot.slane %v1542, 1
        %v1545 = vsel %vm1020, %v1540, %v1544
        %v1547 = vshrl.u32 %v1487, 16
        %v1549 = vshll.u32 %v1487, 16
        %v1551 = vrot.slane %v1549, 1
        %v1552 = vor.u32 %v1547, %v1551
        %v1554 = vshll.u32 %v1527, 16
        %v1556 = vrot.slane %v1554, 1
        %v1557 = vsel %vm1020, %v1552, %v1556
        %v1559 = vshrl.u32 %v1488, 16
        %v1561 = vshll.u32 %v1488, 16
        %v1563 = vrot.slane %v1561, 1
        %v1564 = vor.u32 %v1559, %v1563
        %v1566 = vshll.u32 %v1528, 16
        %v1568 = vrot.slane %v1566, 1
        %v1569 = vsel %vm1020, %v1564, %v1568
        %v1571 = vshrl.u32 %v1489, 16
        %v1573 = vshll.u32 %v1489, 16
        %v1575 = vrot.slane %v1573, 1
        %v1576 = vor.u32 %v1571, %v1575
        %v1578 = vshll.u32 %v1529, 16
        %v1580 = vrot.slane %v1578, 1
        %v1581 = vsel %vm1020, %v1576, %v1580
        %v1583 = vshrl.u32 %v1490, 16
        %v1585 = vshll.u32 %v1490, 16
        %v1587 = vrot.slane %v1585, 1
        %v1588 = vor.u32 %v1583, %v1587
        %v1590 = vshll.u32 %v1530, 16
        %v1592 = vrot.slane %v1590, 1
        %v1593 = vsel %vm1020, %v1588, %v1592
        %v1595 = vshrl.u32 %v1491, 16
        %v1597 = vshll.u32 %v1491, 16
        %v1599 = vrot.slane %v1597, 1
        %v1600 = vor.u32 %v1595, %v1599
        %v1602 = vshll.u32 %v1531, 16
        %v1604 = vrot.slane %v1602, 1
        %v1605 = vsel %vm1020, %v1600, %v1604
        %v1607 = vshrl.u32 %v1492, 16
        %v1609 = vshll.u32 %v1492, 16
        %v1611 = vrot.slane %v1609, 1
        %v1612 = vor.u32 %v1607, %v1611
        %v1614 = vshll.u32 %v1532, 16
        %v1616 = vrot.slane %v1614, 1
        %v1617 = vsel %vm1020, %v1612, %v1616
        %v1619 = vshrl.u32 %v1493, 16
        %v1621 = vshll.u32 %v1493, 16
        %v1623 = vrot.slane %v1621, 1
        %v1624 = vor.u32 %v1619, %v1623
        %v1626 = vshll.u32 %v1533, 16
        %v1628 = vrot.slane %v1626, 1
        %v1629 = vsel %vm1020, %v1624, %v1628
        %1630 = vrot.lane.b32.xlu0 %v1545, 28
        %v1631 = vpop.permute.xlu0 %1630
        %1632 = vrot.lane.b32.xlu0 %v1557, 28
        %v1633 = vpop.permute.xlu0 %1632
        %1634 = vrot.lane.b32.xlu0 %v1569, 28
        %v1635 = vpop.permute.xlu0 %1634
        %1636 = vrot.lane.b32.xlu0 %v1581, 28
        %v1637 = vpop.permute.xlu0 %1636
        %1638 = vrot.lane.b32.xlu0 %v1593, 28
        %v1639 = vpop.permute.xlu0 %1638
        %1640 = vrot.lane.b32.xlu0 %v1605, 28
        %v1641 = vpop.permute.xlu0 %1640
        %1642 = vrot.lane.b32.xlu0 %v1617, 28
        %v1643 = vpop.permute.xlu0 %1642
        %1644 = vrot.lane.b32.xlu0 %v1629, 28
        %v1645 = vpop.permute.xlu0 %1644
        %v1654 = vunpack.c.l.b16 %v948
        %v1655 = vunpack.c.l.b16 %v949
        %v1656 = vunpack.c.l.b16 %v950
        %v1657 = vunpack.c.l.b16 %v951
        %v1658 = vunpack.c.l.b16 %v952
        %v1659 = vunpack.c.l.b16 %v953
        %v1660 = vunpack.c.l.b16 %v954
        %v1661 = vunpack.c.l.b16 %v955
        %v1662 = vpack.c.b16 %v1471, %v1654
        %v1663 = vpack.c.b16 %v1473, %v1655
        %v1664 = vpack.c.b16 %v1475, %v1656
        %v1665 = vpack.c.b16 %v1477, %v1657
        %v1666 = vpack.c.b16 %v1479, %v1658
        %v1667 = vpack.c.b16 %v1481, %v1659
        %v1668 = vpack.c.b16 %v1483, %v1660
        %v1669 = vpack.c.b16 %v1485, %v1661
        %v1670 = vrot.slane %v1662, 1
        %v1671 = vrot.slane %v1526, 1
        %v1672 = vsel %vm1157, %v1670, %v1671
        %v1673 = vrot.slane %v1663, 1
        %v1674 = vrot.slane %v1527, 1
        %v1675 = vsel %vm1157, %v1673, %v1674
        %v1676 = vrot.slane %v1664, 1
        %v1677 = vrot.slane %v1528, 1
        %v1678 = vsel %vm1157, %v1676, %v1677
        %v1679 = vrot.slane %v1665, 1
        %v1680 = vrot.slane %v1529, 1
        %v1681 = vsel %vm1157, %v1679, %v1680
        %v1682 = vrot.slane %v1666, 1
        %v1683 = vrot.slane %v1530, 1
        %v1684 = vsel %vm1157, %v1682, %v1683
        %v1685 = vrot.slane %v1667, 1
        %v1686 = vrot.slane %v1531, 1
        %v1687 = vsel %vm1157, %v1685, %v1686
        %v1688 = vrot.slane %v1668, 1
        %v1689 = vrot.slane %v1532, 1
        %v1690 = vsel %vm1157, %v1688, %v1689
        %v1691 = vrot.slane %v1669, 1
        %v1692 = vrot.slane %v1533, 1
        %v1693 = vsel %vm1157, %v1691, %v1692
        %1694 = vrot.lane.b32.xlu0 %v1672, 32
        %v1695 = vpop.permute.xlu0 %1694
        %1696 = vrot.lane.b32.xlu0 %v1675, 32
        %v1697 = vpop.permute.xlu0 %1696
        %1698 = vrot.lane.b32.xlu0 %v1678, 32
        %v1699 = vpop.permute.xlu0 %1698
        %1700 = vrot.lane.b32.xlu0 %v1681, 32
        %v1701 = vpop.permute.xlu0 %1700
        %1702 = vrot.lane.b32.xlu0 %v1684, 32
        %v1703 = vpop.permute.xlu0 %1702
        %1704 = vrot.lane.b32.xlu0 %v1687, 32
        %v1705 = vpop.permute.xlu0 %1704
        %1706 = vrot.lane.b32.xlu0 %v1690, 32
        %v1707 = vpop.permute.xlu0 %1706
        %1708 = vrot.lane.b32.xlu0 %v1693, 32
        %v1709 = vpop.permute.xlu0 %1708
        %vm1710 = vcmask 31744
        %v1712 = vsel %vm1710, %v988, %v1118
        %v1714 = vsel %vm1710, %v989, %v1120
        %v1716 = vsel %vm1710, %v990, %v1122
        %v1718 = vsel %vm1710, %v991, %v1124
        %v1720 = vsel %vm1710, %v992, %v1126
        %v1722 = vsel %vm1710, %v993, %v1128
        %v1724 = vsel %vm1710, %v994, %v1130
        %v1726 = vsel %vm1710, %v995, %v1132
        %vm1727 = vcmask 64512
        %v1729 = vsel %vm1727, %v1712, %v1183
        %v1731 = vsel %vm1727, %v1714, %v1185
        %v1733 = vsel %vm1727, %v1716, %v1187
        %v1735 = vsel %vm1727, %v1718, %v1189
        %v1737 = vsel %vm1727, %v1720, %v1191
        %v1739 = vsel %vm1727, %v1722, %v1193
        %v1741 = vsel %vm1727, %v1724, %v1195
        %v1743 = vsel %vm1727, %v1726, %v1197
        %vm1744 = vcmask 97280
        %v1746 = vsel %vm1744, %v1729, %v1239
        %v1748 = vsel %vm1744, %v1731, %v1241
        %v1750 = vsel %vm1744, %v1733, %v1243
        %v1752 = vsel %vm1744, %v1735, %v1245
        %v1754 = vsel %vm1744, %v1737, %v1247
        %v1756 = vsel %vm1744, %v1739, %v1249
        %v1758 = vsel %vm1744, %v1741, %v1251
        %v1760 = vsel %vm1744, %v1743, %v1253
        %vm1761 = vcmask 130048
        %v1763 = vsel %vm1761, %v1746, %v1375
        %v1765 = vsel %vm1761, %v1748, %v1377
        %v1767 = vsel %vm1761, %v1750, %v1379
        %v1769 = vsel %vm1761, %v1752, %v1381
        %v1771 = vsel %vm1761, %v1754, %v1383
        %v1773 = vsel %vm1761, %v1756, %v1385
        %v1775 = vsel %vm1761, %v1758, %v1387
        %v1777 = vsel %vm1761, %v1760, %v1389
        %vm1778 = vcmask 162816
        %v1780 = vsel %vm1778, %v1763, %v1439
        %v1782 = vsel %vm1778, %v1765, %v1441
        %v1784 = vsel %vm1778, %v1767, %v1443
        %v1786 = vsel %vm1778, %v1769, %v1445
        %v1788 = vsel %vm1778, %v1771, %v1447
        %v1790 = vsel %vm1778, %v1773, %v1449
        %v1792 = vsel %vm1778, %v1775, %v1451
        %v1794 = vsel %vm1778, %v1777, %v1453
        %vm1795 = vcmask 195584
        %v1797 = vsel %vm1795, %v1780, %v1495
        %v1799 = vsel %vm1795, %v1782, %v1497
        %v1801 = vsel %vm1795, %v1784, %v1499
        %v1803 = vsel %vm1795, %v1786, %v1501
        %v1805 = vsel %vm1795, %v1788, %v1503
        %v1807 = vsel %vm1795, %v1790, %v1505
        %v1809 = vsel %vm1795, %v1792, %v1507
        %v1811 = vsel %vm1795, %v1794, %v1509
        %vm1812 = vcmask 228352
        %v1814 = vsel %vm1812, %v1797, %v1631
        %v1816 = vsel %vm1812, %v1799, %v1633
        %v1818 = vsel %vm1812, %v1801, %v1635
        %v1820 = vsel %vm1812, %v1803, %v1637
        %v1822 = vsel %vm1812, %v1805, %v1639
        %v1824 = vsel %vm1812, %v1807, %v1641
        %v1826 = vsel %vm1812, %v1809, %v1643
        %v1828 = vsel %vm1812, %v1811, %v1645
        %vm1829 = vcmask 261120
        %v1831 = vsel %vm1829, %v1814, %v1695
        %v1833 = vsel %vm1829, %v1816, %v1697
        %v1835 = vsel %vm1829, %v1818, %v1699
        %v1837 = vsel %vm1829, %v1820, %v1701
        %v1839 = vsel %vm1829, %v1822, %v1703
        %v1841 = vsel %vm1829, %v1824, %v1705
        %v1843 = vsel %vm1829, %v1826, %v1707
        %v1845 = vsel %vm1829, %v1828, %v1709
        %v1846 = vld [vmem:[%s3] sm:$0xf]
        %v1847 = vld [vmem:[%s3 + $0x4] sm:$0xf]
        %v1848 = vld [vmem:[%s3 + $0x8] sm:$0xf]
        %v1849 = vld [vmem:[%s3 + $0xc] sm:$0xf]
        %v1850 = vld [vmem:[%s3 + $0x10] sm:$0x3]
        %v1856 = vunpack.c.l.b16 %v1846
        %v1857 = vunpack.c.l.b16 %v1847
        %v1858 = vunpack.c.l.b16 %v1848
        %v1859 = vunpack.c.l.b16 %v1849
        %v1860 = vunpack.c.l.b16 %v1850
        %v1861 = vpack.c.b16 %v1857, %v1856
        %v1862 = vpack.c.b16 %v1859, %v1858
        %v1863 = vpack.c.b16 %v1860, %v1860
        %vm1866 = vcmask 293888
        %v1867 = vsel %vm1866, %v1831, 0
        %v1869 = vsel %vm1866, %v1833, 0
        %v1871 = vsel %vm1866, %v1835, 0
        %v1873 = vsel %vm1866, %v1837, 0
        %v1875 = vsel %vm1866, %v1839, 0
        %v1877 = vsel %vm1866, %v1841, 0
        %v1879 = vsel %vm1866, %v1843, 0
        %v1881 = vsel %vm1866, %v1845, 0
        %vm1883 = vcmask 1041408
        %v1885 = vsel %vm1883, %v1863, 0
        %1887 = vmatprep.subr.bf16.mxu0 0
        %1888 = vmatpush1.bf16.msra.mxu0 %v1861
        %1889 = vmatprep.subr.bf16.mxu0 0
        %1890 = vmatpush1.bf16.msra.mxu0 %v1862
        %1891 = vmatprep.subr.bf16.mxu0 0
        %1892 = vmatpush1.bf16.msra.mxu0 %v1885
        %1893 = vmatprep.subr.bf16.mxu0 0
        %1894 = vmatpush1.bf16.msra.mxu0 0
        %1895 = vmatprep.subr.bf16.mxu0 0
        %1896 = vmatpush1.bf16.msra.mxu0 0
        %1897 = vmatprep.subr.bf16.mxu0 0
        %1898 = vmatpush1.bf16.msra.mxu0 0
        %1899 = vmatprep.subr.bf16.mxu0 0
        %1900 = vmatpush1.bf16.msra.mxu0 0
        %1901 = vmatprep.subr.bf16.mxu0 0
        %1902 = vmatpush1.bf16.msra.mxu0 0
        %1903 = vmatprep.subr.bf16.mxu0 0
        %1904 = vmatpush1.bf16.msra.mxu0 0
        %1905 = vmatprep.subr.bf16.mxu0 0
        %1906 = vmatpush1.bf16.msra.mxu0 0
        %1907 = vmatprep.subr.bf16.mxu0 0
        %1908 = vmatpush1.bf16.msra.mxu0 0
        %1909 = vmatprep.subr.bf16.mxu0 0
        %1910 = vmatpush1.bf16.msra.mxu0 0
        %1911 = vmatprep.subr.bf16.mxu0 0
        %1912 = vmatpush1.bf16.msra.mxu0 0
        %1913 = vmatprep.subr.bf16.mxu0 0
        %1914 = vmatpush1.bf16.msra.mxu0 0
        %1915 = vmatprep.subr.bf16.mxu0 0
        %1916 = vmatpush1.bf16.msra.mxu0 0
        %1917 = vmatprep.subr.bf16.mxu0 0
        %1918 = vmatpush1.bf16.msra.mxu0 0
        %1919 = vmatprep.mubr.bf16.mxu0 0
        %1920 = vmatmul.mubr.bf16.gmra.mrb[0].mxu0 %v1867
        %v1921 = vpop.f32.mrb[0].mxu0
        %v1922 = vadd.f32 0.0, %v1921
        %v1923 = vpop.f32.mrb[0].mxu0
        %v1924 = vpop.f32.mrb[0].mxu0
        %v1925 = vadd.f32 0.0, %v1924
        %v1926 = vpop.f32.mrb[0].mxu0
        %1927 = vmatprep.mubr.bf16.mxu0 0
        %1928 = vmatmul.mubr.bf16.gmra.mrb[0].mxu0 %v1869
        %v1929 = vpop.f32.mrb[0].mxu0
        %v1930 = vadd.f32 0.0, %v1929
        %v1931 = vpop.f32.mrb[0].mxu0
        %v1932 = vpop.f32.mrb[0].mxu0
        %v1933 = vadd.f32 0.0, %v1932
        %v1934 = vpop.f32.mrb[0].mxu0
        %1935 = vmatprep.mubr.bf16.mxu0 0
        %1936 = vmatmul.mubr.bf16.gmra.mrb[0].mxu0 %v1871
        %v1937 = vpop.f32.mrb[0].mxu0
        %v1938 = vadd.f32 0.0, %v1937
        %v1939 = vpop.f32.mrb[0].mxu0
        %v1940 = vpop.f32.mrb[0].mxu0
        %v1941 = vadd.f32 0.0, %v1940
        %v1942 = vpop.f32.mrb[0].mxu0
        %1943 = vmatprep.mubr.bf16.mxu0 0
        %1944 = vmatmul.mubr.bf16.gmra.mrb[0].mxu0 %v1873
        %v1945 = vpop.f32.mrb[0].mxu0
        %v1946 = vadd.f32 0.0, %v1945
        %v1947 = vpop.f32.mrb[0].mxu0
        %v1948 = vpop.f32.mrb[0].mxu0
        %v1949 = vadd.f32 0.0, %v1948
        %v1950 = vpop.f32.mrb[0].mxu0
        %1951 = vmatprep.mubr.bf16.mxu0 0
        %1952 = vmatmul.mubr.bf16.gmra.mrb[0].mxu0 %v1875
        %v1953 = vpop.f32.mrb[0].mxu0
        %v1954 = vadd.f32 0.0, %v1953
        %v1955 = vpop.f32.mrb[0].mxu0
        %v1956 = vpop.f32.mrb[0].mxu0
        %v1957 = vadd.f32 0.0, %v1956
        %v1958 = vpop.f32.mrb[0].mxu0
        %1959 = vmatprep.mubr.bf16.mxu0 0
        %1960 = vmatmul.mubr.bf16.gmra.mrb[0].mxu0 %v1877
        %v1961 = vpop.f32.mrb[0].mxu0
        %v1962 = vadd.f32 0.0, %v1961
        %v1963 = vpop.f32.mrb[0].mxu0
        %v1964 = vpop.f32.mrb[0].mxu0
        %v1965 = vadd.f32 0.0, %v1964
        %v1966 = vpop.f32.mrb[0].mxu0
        %1967 = vmatprep.mubr.bf16.mxu0 0
        %1968 = vmatmul.mubr.bf16.gmra.mrb[0].mxu0 %v1879
        %v1969 = vpop.f32.mrb[0].mxu0
        %v1970 = vadd.f32 0.0, %v1969
        %v1971 = vpop.f32.mrb[0].mxu0
        %v1972 = vpop.f32.mrb[0].mxu0
        %v1973 = vadd.f32 0.0, %v1972
        %v1974 = vpop.f32.mrb[0].mxu0
        %1975 = vmatprep.mubr.bf16.mxu0 0
        %1976 = vmatmul.mubr.bf16.gmra.mrb[0].mxu0 %v1881
        %v1977 = vpop.f32.mrb[0].mxu0
        %v1978 = vadd.f32 0.0, %v1977
        %v1979 = vpop.f32.mrb[0].mxu0
        %v1980 = vpop.f32.mrb[0].mxu0
        %v1981 = vadd.f32 0.0, %v1980
        %v1982 = vpop.f32.mrb[0].mxu0
        %1983 = vdwg.mxu0
        %v1984 = vpack.c.bf16 %v1925, %v1922
        %v1985 = vpack.c.bf16 %v1933, %v1930
        %v1986 = vpack.c.bf16 %v1941, %v1938
        %v1987 = vpack.c.bf16 %v1949, %v1946
        %v1988 = vpack.c.bf16 %v1957, %v1954
        %v1989 = vpack.c.bf16 %v1965, %v1962
        %v1990 = vpack.c.bf16 %v1973, %v1970
        %v1991 = vpack.c.bf16 %v1981, %v1978
        %v2000 = vunpack.c.l.b16 %v1984
        %v2001 = vunpack.c.h.b16 %v1984
        %v2002 = vunpack.c.l.b16 %v1985
        %v2003 = vunpack.c.h.b16 %v1985
        %v2004 = vunpack.c.l.b16 %v1986
        %v2005 = vunpack.c.h.b16 %v1986
        %v2006 = vunpack.c.l.b16 %v1987
        %v2007 = vunpack.c.h.b16 %v1987
        %v2008 = vunpack.c.l.b16 %v1988
        %v2009 = vunpack.c.h.b16 %v1988
        %v2010 = vunpack.c.l.b16 %v1989
        %v2011 = vunpack.c.h.b16 %v1989
        %v2012 = vunpack.c.l.b16 %v1990
        %v2013 = vunpack.c.h.b16 %v1990
        %v2014 = vunpack.c.l.b16 %v1991
        %v2015 = vunpack.c.h.b16 %v1991
        %v2016 = vpack.c.b16 %v2000, %v2000
        %v2017 = vpack.c.b16 %v2001, %v2001
        %v2018 = vpack.c.b16 %v2002, %v2002
        %v2019 = vpack.c.b16 %v2003, %v2003
        %v2020 = vpack.c.b16 %v2004, %v2004
        %v2021 = vpack.c.b16 %v2005, %v2005
        %v2022 = vpack.c.b16 %v2006, %v2006
        %v2023 = vpack.c.b16 %v2007, %v2007
        %v2024 = vpack.c.b16 %v2008, %v2008
        %v2025 = vpack.c.b16 %v2009, %v2009
        %v2026 = vpack.c.b16 %v2010, %v2010
        %v2027 = vpack.c.b16 %v2011, %v2011
        %v2028 = vpack.c.b16 %v2012, %v2012
        %v2029 = vpack.c.b16 %v2013, %v2013
        %v2030 = vpack.c.b16 %v2014, %v2014
        %v2031 = vpack.c.b16 %v2015, %v2015
        %vm2048 = vcmask 60416
        %2049 = vst.msk [vmem:[%s456] sm:$0xf] %vm2048, %v2016
        %2050 = vst.msk [vmem:[%s456 + $0x4] sm:$0xf] %vm2048, %v2017
        %2051 = vst.msk [vmem:[%s456 + $0x8] sm:$0xf] %vm2048, %v2018
        %2052 = vst.msk [vmem:[%s456 + $0xc] sm:$0xf] %vm2048, %v2019
        %2053 = vst.msk [vmem:[%s456 + $0x10] sm:$0xf] %vm2048, %v2020
        %2054 = vst.msk [vmem:[%s456 + $0x14] sm:$0xf] %vm2048, %v2021
        %2055 = vst.msk [vmem:[%s456 + $0x18] sm:$0xf] %vm2048, %v2022
        %2056 = vst.msk [vmem:[%s456 + $0x1c] sm:$0xf] %vm2048, %v2023
        %2057 = vst.msk [vmem:[%s456 + $0x20] sm:$0xf] %vm2048, %v2024
        %2058 = vst.msk [vmem:[%s456 + $0x24] sm:$0xf] %vm2048, %v2025
        %2059 = vst.msk [vmem:[%s456 + $0x28] sm:$0xf] %vm2048, %v2026
        %2060 = vst.msk [vmem:[%s456 + $0x2c] sm:$0xf] %vm2048, %v2027
        %2061 = vst.msk [vmem:[%s456 + $0x30] sm:$0xf] %vm2048, %v2028
        %2062 = vst.msk [vmem:[%s456 + $0x34] sm:$0xf] %vm2048, %v2029
        %2063 = vst.msk [vmem:[%s456 + $0x38] sm:$0xf] %vm2048, %v2030
        %2064 = vst.msk [vmem:[%s456 + $0x3c] sm:$0xf] %vm2048, %v2031
        %v2065 = vsel %vm1727, %v1922, 0.0
        %v2066 = vsel %vm1727, %v1925, 0.0
        %v2067 = vadd.f32 %v2065, %v2066
        %v2068 = vsel %vm1727, %v1930, 0.0
        %v2069 = vadd.f32 %v2067, %v2068
        %v2070 = vsel %vm1727, %v1933, 0.0
        %v2071 = vadd.f32 %v2069, %v2070
        %v2072 = vsel %vm1727, %v1938, 0.0
        %v2073 = vadd.f32 %v2071, %v2072
        %v2074 = vsel %vm1727, %v1941, 0.0
        %v2075 = vadd.f32 %v2073, %v2074
        %v2076 = vsel %vm1727, %v1946, 0.0
        %v2077 = vadd.f32 %v2075, %v2076
        %v2078 = vsel %vm1727, %v1949, 0.0
        %v2079 = vadd.f32 %v2077, %v2078
        %v2080 = vsel %vm1727, %v1954, 0.0
        %v2081 = vadd.f32 %v2079, %v2080
        %v2082 = vsel %vm1727, %v1957, 0.0
        %v2083 = vadd.f32 %v2081, %v2082
        %v2084 = vsel %vm1727, %v1962, 0.0
        %v2085 = vadd.f32 %v2083, %v2084
        %v2086 = vsel %vm1727, %v1965, 0.0
        %v2087 = vadd.f32 %v2085, %v2086
        %v2088 = vsel %vm1727, %v1970, 0.0
        %v2089 = vadd.f32 %v2087, %v2088
        %v2090 = vsel %vm1727, %v1973, 0.0
        %v2091 = vadd.f32 %v2089, %v2090
        %v2092 = vsel %vm1727, %v1978, 0.0
        %v2093 = vadd.f32 %v2091, %v2092
        %v2094 = vsel %vm1727, %v1981, 0.0
        %v2095 = vadd.f32 %v2093, %v2094
        %v2096 = vrot.slane %v2095, 4
        %v2097 = vadd.f32 %v2095, %v2096
        %v2098 = vrot.slane %v2097, 2
        %v2099 = vadd.f32 %v2097, %v2098
        %v2100 = vrot.slane %v2099, 1
        %v2101 = vadd.f32 %v2099, %v2100
        %v2102 = vmul.f32 %v2101, 0.0078125
        %v2103 = vsub.f32 %v1922, %v2102
        %v2104 = vsub.f32 %v1925, %v2102
        %v2105 = vsub.f32 %v1930, %v2102
        %v2106 = vsub.f32 %v1933, %v2102
        %v2107 = vsub.f32 %v1938, %v2102
        %v2108 = vsub.f32 %v1941, %v2102
        %v2109 = vsub.f32 %v1946, %v2102
        %v2110 = vsub.f32 %v1949, %v2102
        %v2111 = vsub.f32 %v1954, %v2102
        %v2112 = vsub.f32 %v1957, %v2102
        %v2113 = vsub.f32 %v1962, %v2102
        %v2114 = vsub.f32 %v1965, %v2102
        %v2115 = vsub.f32 %v1970, %v2102
        %v2116 = vsub.f32 %v1973, %v2102
        %v2117 = vsub.f32 %v1978, %v2102
        %v2118 = vsub.f32 %v1981, %v2102
        %v2119 = vmul.f32 %v2103, %v2103
        %v2120 = vmul.f32 %v2104, %v2104
        %v2121 = vmul.f32 %v2105, %v2105
        %v2122 = vmul.f32 %v2106, %v2106
        %v2123 = vmul.f32 %v2107, %v2107
        %v2124 = vmul.f32 %v2108, %v2108
        %v2125 = vmul.f32 %v2109, %v2109
        %v2126 = vmul.f32 %v2110, %v2110
        %v2127 = vmul.f32 %v2111, %v2111
        %v2128 = vmul.f32 %v2112, %v2112
        %v2129 = vmul.f32 %v2113, %v2113
        %v2130 = vmul.f32 %v2114, %v2114
        %v2131 = vmul.f32 %v2115, %v2115
        %v2132 = vmul.f32 %v2116, %v2116
        %v2133 = vmul.f32 %v2117, %v2117
        %v2134 = vmul.f32 %v2118, %v2118
        %v2135 = vsel %vm1727, %v2119, 0.0
        %v2136 = vsel %vm1727, %v2120, 0.0
        %v2137 = vadd.f32 %v2135, %v2136
        %v2138 = vsel %vm1727, %v2121, 0.0
        %v2139 = vadd.f32 %v2137, %v2138
        %v2140 = vsel %vm1727, %v2122, 0.0
        %v2141 = vadd.f32 %v2139, %v2140
        %v2142 = vsel %vm1727, %v2123, 0.0
        %v2143 = vadd.f32 %v2141, %v2142
        %v2144 = vsel %vm1727, %v2124, 0.0
        %v2145 = vadd.f32 %v2143, %v2144
        %v2146 = vsel %vm1727, %v2125, 0.0
        %v2147 = vadd.f32 %v2145, %v2146
        %v2148 = vsel %vm1727, %v2126, 0.0
        %v2149 = vadd.f32 %v2147, %v2148
        %v2150 = vsel %vm1727, %v2127, 0.0
        %v2151 = vadd.f32 %v2149, %v2150
        %v2152 = vsel %vm1727, %v2128, 0.0
        %v2153 = vadd.f32 %v2151, %v2152
        %v2154 = vsel %vm1727, %v2129, 0.0
        %v2155 = vadd.f32 %v2153, %v2154
        %v2156 = vsel %vm1727, %v2130, 0.0
        %v2157 = vadd.f32 %v2155, %v2156
        %v2158 = vsel %vm1727, %v2131, 0.0
        %v2159 = vadd.f32 %v2157, %v2158
        %v2160 = vsel %vm1727, %v2132, 0.0
        %v2161 = vadd.f32 %v2159, %v2160
        %v2162 = vsel %vm1727, %v2133, 0.0
        %v2163 = vadd.f32 %v2161, %v2162
        %v2164 = vsel %vm1727, %v2134, 0.0
        %v2165 = vadd.f32 %v2163, %v2164
        %v2166 = vrot.slane %v2165, 4
        %v2167 = vadd.f32 %v2165, %v2166
        %v2168 = vrot.slane %v2167, 2
        %v2169 = vadd.f32 %v2167, %v2168
        %v2170 = vrot.slane %v2169, 1
        %v2171 = vadd.f32 %v2169, %v2170
        %vm2172 = vcmask 1040384
        %v2173 = vsel %vm2172, %v2102, %v2171
        %v2174 = vsel %vm1883, %v2173, 0.0
        %2175 = vst.msk [vmem:[%s402] sm:$0xff] %vm1727, %v2174
        %s2176 = smul.u32 16, %s27
        %p2177 = scmp.lt.s32.totalorder %s26, 1
        %s2178 = scalar_select %p2177, %s26, 1
        %p2179 = scmp.lt.s32.totalorder %s2176, 31
        %s2180 = scalar_select %p2179, %s2176, 31
        %s2181 = smul.addr %s2178, 32
        %s2182 = sadd.s32 %s2180, %s2181
        %s2183 = smul.addr %s2182, 4
        %s2184 = scalar_lea.vmem %s6, %s2183
        %s2185 = sand.u32 %s235, 1
        %s2186 = scalar_lea.sflag [#allocation4], %s2185
        %s2187 = sand.u32 %s235, 1
        %s2188 = smul.addr %s2187, 8
        %s2189 = scalar_lea.vmem [#allocation3], %s2188
        // Predicated region
        $region45: #{tpu_custom_call.1} parent=43 // pred_check
          %p2190 = pneg %p217
        $region46: #{tpu_custom_call.1} parent=43 // pred_check_branch
          %2192 = sbr.rel (%p2190) target = $region48
        $region47: #{tpu_custom_call.1} parent=43 // pred_region
          %s2193 = smul.u32 16, %s27
        $region48: #{tpu_custom_call.1} parent=43 // pred_fallthru
          _
        // Predicated region
        $region49: #{tpu_custom_call.1} parent=43 // pred_check
          %p2194 = pneg %p245
        $region50: #{tpu_custom_call.1} parent=43 // pred_check_branch
          %2196 = sbr.rel (%p2194) target = $region52
        $region51: #{tpu_custom_call.1} parent=43 // pred_region
          %s2198 = ssub.s32 128, 128
          %2199 = vsyncadd %s2186, %s2198
          %s2200 = smul.addr %s26, 2
          %s2201 = sadd.s32 %s27, %s2200
          %s2202 = smul.addr %s2201, 128
          %s2203 = scalar_lea.hbm %s7, %s2202
          %s2205 = sshll.u32 %s2189, 4
          %s2206 = int_to_ptr.vmem [resolvable:$true] %s2205
          %2208 = dma.vmem_to_hbm [thread:$0]  %s2206, 128, %s2203, %s2186
        $region52: #{tpu_custom_call.1} parent=43 // pred_fallthru
          _
      $region44: #{tpu_custom_call.1} parent=5 // pred_fallthru
        _
      %p2209 = scmp.le.s32.totalorder 2, %s17
      // Predicated region
      $region53: #{tpu_custom_call.1} parent=5 // pred_check
        %p2210 = pneg %p2209
      $region54: #{tpu_custom_call.1} parent=5 // pred_check_branch
        %2212 = sbr.rel (%p2210) target = $region56
      $region55: #{tpu_custom_call.1} parent=5 // pred_region
        %s2213 = ssub.s32 %s17, 2
        // Predicated region
        $region57: #{tpu_custom_call.1} parent=55 // pred_check
          %p2214 = pneg %p223
        $region58: #{tpu_custom_call.1} parent=55 // pred_check_branch
          %2216 = sbr.rel (%p2214) target = $region60
        $region59: #{tpu_custom_call.1} parent=55 // pred_region
          %s2217 = smul.u32 16, %s29
          %p2218 = scmp.lt.s32.totalorder %s28, 1
          %s2219 = scalar_select %p2218, %s28, 1
          %p2220 = scmp.lt.s32.totalorder %s2217, 31
          %s2221 = scalar_select %p2220, %s2217, 31
          %s2222 = smul.addr %s2219, 32
          %s2223 = sadd.s32 %s2221, %s2222
          %s2224 = smul.addr %s2223, 4
          %s2225 = scalar_lea.vmem %s6, %s2224
        $region60: #{tpu_custom_call.1} parent=55 // pred_fallthru
          _
        // Predicated region
        $region61: #{tpu_custom_call.1} parent=55 // pred_check
          %p2226 = pneg %p251
        $region62: #{tpu_custom_call.1} parent=55 // pred_check_branch
          %2228 = sbr.rel (%p2226) target = $region64
        $region63: #{tpu_custom_call.1} parent=55 // pred_region
          %s2229 = sand.u32 %s236, 1
          %s2230 = scalar_lea.sflag [#allocation4], %s2229
          %s2231 = sand.u32 %s236, 1
          %s2232 = smul.addr %s2231, 8
          %s2233 = scalar_lea.vmem [#allocation3], %s2232
          %2234 = dma.done %s2230, 128
        $region64: #{tpu_custom_call.1} parent=55 // pred_fallthru
          _
      $region56: #{tpu_custom_call.1} parent=5 // pred_fallthru
        _
    $region6: #{tpu_custom_call.1} parent=1 // loop_footer
      %s21 = sadd.s32 1, %s17
    $region7: #{tpu_custom_call.1} parent=1 // loop_footer_branch
      %16 = sbr.rel target = $region3
    $region8: #{tpu_custom_call.1} parent=1 // loop_exit
      _
    %2235 = vsyncpa [#allocation4], 1
    %s2236 = scalar_lea.sflag [#allocation4], 1
    %2237 = vsyncpa %s2236, 1

</llo_original>
